<compile_context>
chip_gen: v6e
topology: v6e:2x2x1
jax: 0.10.0
libtpu: 0.0.40
codegen_flags: <defaults>
</compile_context>

<pallas_src>
import jax
import jax.numpy as jnp
from jax.experimental import pallas as pl
from jax.experimental.pallas import tpu as pltpu


def _round_up(x, m):
    return ((x + m - 1) // m) * m


def _pad2(x, rows, cols):
    return jnp.pad(x, ((0, rows - x.shape[0]), (0, cols - x.shape[1])))


# ----------------------------------------------------------------------------
# Kernel: one grid step == one AGCN layer (+ in-MLP at step 0, out-MLP at last)
# ----------------------------------------------------------------------------
def agcn_kernel(gates_ref,                                   # scalar prefetch (SMEM)
                x_ref, w_in_ref, w_l_ref, w_out_ref, a_hbm,  # inputs
                o_ref,                                       # output
                a_vmem, h_ref, h0_ref, a_sem):               # scratch
    f32 = jnp.float32
    bf16 = jnp.bfloat16
    l = pl.program_id(0)
    last = pl.num_programs(0) - 1

    # ---- step 0: in-MLP, overlapped with the one-time A_hat HBM->VMEM DMA ----
    @pl.when(l == 0)
    def _():
        cp = pltpu.make_async_copy(a_hbm, a_vmem, a_sem)
        cp.start()
        h = jnp.dot(x_ref[...], w_in_ref[...], preferred_element_type=f32)
        h = jnp.maximum(h, 0.0)
        h_ref[...] = h.astype(bf16)   # H is only ever consumed as a bf16 MXU operand
        h0_ref[...] = h               # H0 (initial_features) kept in f32
        cp.wait()

    # ---- AGCN layer l:  p = A_hat @ H ;  m = g*p + (1-g)*H0 ;  H = relu(m @ W_l)
    g = gates_ref[l]                  # sigmoid(gate_logit), f32 scalar from SMEM
    p = jnp.dot(a_vmem[...], h_ref[...], preferred_element_type=f32)
    m = g * p + (1.0 - g) * h0_ref[...]
    y = jnp.dot(m.astype(bf16), w_l_ref[0], preferred_element_type=f32)
    h_ref[...] = jnp.maximum(y, 0.0).astype(bf16)

    # ---- last step: out-MLP (no activation), lane-dense f32 store ----
    @pl.when(l == last)
    def _():
        o_ref[...] = jnp.dot(h_ref[...], w_out_ref[...], preferred_element_type=f32)


# ----------------------------------------------------------------------------
# Wrapper: bf16 operands, 128-multiple padding, single pallas_call
# ----------------------------------------------------------------------------
def agcn_net_forward(a_hat, features, params):
    n, f = features.shape
    num_hidden = params["w_in"].shape[1]
    num_classes = params["w_out"].shape[1]
    num_layers = len(params["w_layers"])
    assert num_layers >= 1

    n_pad = _round_up(n, 128)
    f_pad = _round_up(f, 128)
    h_pad = _round_up(num_hidden, 128)
    c_pad = _round_up(num_classes, 128)

    bf16 = jnp.bfloat16
    # bf16 casts happen here (halves HBM->VMEM bytes); no in-kernel casts of inputs.
    a_p = _pad2(a_hat.astype(bf16), n_pad, n_pad)
    x_p = _pad2(features.astype(bf16), n_pad, f_pad)
    w_in_p = _pad2(params["w_in"].astype(bf16), f_pad, h_pad)
    w_layers_p = jnp.stack(
        [_pad2(w.astype(bf16), h_pad, h_pad) for w in params["w_layers"]])
    w_out_p = _pad2(params["w_out"].astype(bf16), h_pad, c_pad)
    # Learnable mixing logits -> sigmoid applied per forward pass.
    gates = jax.nn.sigmoid(
        jnp.asarray(params["gate_logits"], jnp.float32)).reshape(num_layers)

    # --- VMEM budget derived from actual padded shapes (not a hardcoded 32 MiB) ---
    vmem_bytes = (
        n_pad * n_pad * 2          # A_hat scratch: single-buffered bf16
        + 2 * n_pad * f_pad * 2    # X            (auto-pipeline double buffer)
        + 2 * f_pad * h_pad * 2    # W_in
        + 2 * h_pad * h_pad * 2    # W_layers[l]  (double buffer => prefetch of l+1)
        + 2 * h_pad * c_pad * 2    # W_out
        + 2 * n_pad * c_pad * 4    # output block
        + n_pad * h_pad * 2        # H  scratch (bf16)
        + n_pad * h_pad * 4        # H0 scratch (f32)
    )
    # 4 MiB headroom for compiler scratch; clamp to [16 MiB, 96 MiB]
    # (on v7x cap would be ~56 MiB; beyond that switch to streamed-A, see TODO).
    vmem_limit = int(min(max(vmem_bytes + (4 << 20), 16 << 20), 96 << 20))

    flops = (2 * n_pad * f_pad * h_pad
             + num_layers * (2 * n_pad * n_pad * h_pad + 2 * n_pad * h_pad * h_pad)
             + 2 * n_pad * h_pad * c_pad)
    bytes_accessed = ((a_p.size + x_p.size + w_in_p.size + w_layers_p.size
                       + w_out_p.size) * 2 + n_pad * c_pad * 4 + num_layers * 4)

    grid_spec = pltpu.PrefetchScalarGridSpec(
        num_scalar_prefetch=1,                 # gates -> SMEM before the grid runs
        grid=(num_layers,),
        in_specs=[
            pl.BlockSpec((n_pad, f_pad), lambda l, g: (0, 0)),            # X
            pl.BlockSpec((f_pad, h_pad), lambda l, g: (0, 0)),            # W_in
            pl.BlockSpec((1, h_pad, h_pad), lambda l, g: (l, 0, 0)),      # W_layers[l]
            pl.BlockSpec((h_pad, c_pad), lambda l, g: (0, 0)),            # W_out
            pl.BlockSpec(memory_space=pl.ANY),                            # A_hat in HBM
        ],
        out_specs=pl.BlockSpec((n_pad, c_pad), lambda l, g: (0, 0)),
        scratch_shapes=[
            pltpu.VMEM((n_pad, n_pad), jnp.bfloat16),   # A_hat (resident, 1 buffer)
            pltpu.VMEM((n_pad, h_pad), jnp.bfloat16),   # H
            pltpu.VMEM((n_pad, h_pad), jnp.float32),    # H0
            pltpu.SemaphoreType.DMA,                    # A_hat copy completion
        ],
    )

    out_p = pl.pallas_call(
        agcn_kernel,
        out_shape=jax.ShapeDtypeStruct((n_pad, c_pad), jnp.float32),
        grid_spec=grid_spec,
        compiler_params=pltpu.CompilerParams(
            dimension_semantics=("arbitrary",),   # state carries across layer steps
            vmem_limit_bytes=vmem_limit,
        ),
        cost_estimate=pl.CostEstimate(
            flops=flops, transcendentals=0, bytes_accessed=bytes_accessed),
    )(gates, x_p, w_in_p, w_layers_p, w_out_p, a_p)

    return out_p[:n, :num_classes]


agcn_net_forward_jit = jax.jit(agcn_net_forward)


# ----------------------------------------------------------------------------
# Pure-JAX references
# ----------------------------------------------------------------------------
def agcn_net_reference_f32(a_hat, features, params):
    gates = jax.nn.sigmoid(params["gate_logits"].astype(jnp.float32))
    h = jnp.maximum(features @ params["w_in"], 0.0)
    h0 = h
    for l in range(len(params["w_layers"])):
        g = gates[l]
        p = a_hat @ h
        m = g * p + (1.0 - g) * h0
        h = jnp.maximum(m @ params["w_layers"][l], 0.0)
    return h @ params["w_out"]


def agcn_net_reference_bf16(a_hat, features, params):
    """Emulates the kernel's numerics: bf16 MXU operands, f32 accumulation."""
    bf = lambda t: t.astype(jnp.bfloat16)
    dot = lambda a, b: jnp.dot(bf(a), bf(b), preferred_element_type=jnp.float32)
    gates = jax.nn.sigmoid(params["gate_logits"].astype(jnp.float32))
    h = jnp.maximum(dot(features, params["w_in"]), 0.0)
    h0 = h
    for l in range(len(params["w_layers"])):
        g = gates[l]
        p = dot(a_hat, h)
        m = g * p + (1.0 - g) * h0
        h = jnp.maximum(dot(m, params["w_layers"][l]), 0.0)
    return dot(h, params["w_out"])


# ----------------------------------------------------------------------------
# Param / graph construction
# ----------------------------------------------------------------------------
def make_params(key, num_feats, num_hidden, num_classes, num_layers):
    keys = jax.random.split(key, num_layers + 2)

    def glorot(k, shape):
        fan_in, fan_out = shape
        scale = jnp.sqrt(2.0 / (fan_in + fan_out))
        return scale * jax.random.normal(k, shape, dtype=jnp.float32)

    return {
        "w_in": glorot(keys[0], (num_feats, num_hidden)),
        "w_layers": [glorot(keys[1 + l], (num_hidden, num_hidden))
                     for l in range(num_layers)],
        # learnable mixing logits (sigmoid applied per forward pass)
        "gate_logits": jnp.zeros((num_layers,), dtype=jnp.float32),
        "w_out": glorot(keys[-1], (num_hidden, num_classes)),
    }


def normalize_adjacency(adj):
    """graph_norm=True: A_hat = D^{-1/2} (A + I) D^{-1/2} (plain-JAX preprocessing)."""
    n = adj.shape[0]
    a = adj + jnp.eye(n, dtype=adj.dtype)
    deg = jnp.sum(a, axis=1)
    d_inv_sqrt = jnp.where(deg > 0, 1.0 / jnp.sqrt(deg), 0.0)
    return a * d_inv_sqrt[:, None] * d_inv_sqrt[None, :]


if __name__ == "__main__":
    key = jax.random.PRNGKey(0)
    k_adj, k_feat, k_param = jax.random.split(key, 3)

    # Small synthetic graph: N nodes, dense adjacency.
    N = 64
    NUM_FEATS = 16
    NUM_HIDDEN = 32
    NUM_CLASSES = 8
    NUM_LAYERS = 2

    # Random symmetric binary adjacency (no self loops; added during normalization).
    rand = jax.random.uniform(k_adj, (N, N))
    adj = (rand + rand.T > 1.4).astype(jnp.float32)
    adj = adj * (1.0 - jnp.eye(N, dtype=jnp.float32))
    a_hat = normalize_adjacency(adj)

    features = jax.random.normal(k_feat, (N, NUM_FEATS), dtype=jnp.float32)
    params = make_params(k_param, NUM_FEATS, NUM_HIDDEN, NUM_CLASSES, NUM_LAYERS)

    out = agcn_net_forward_jit(a_hat, features, params)
    out = jax.block_until_ready(out)
    assert out.shape == (N, NUM_CLASSES), out.shape

    # Tight check against a reference with identical numerics (bf16 MXU
    # operands, f32 accumulation).
    ref_bf16 = agcn_net_reference_bf16(a_hat, features, params)
    assert jnp.allclose(out, ref_bf16, atol=2e-3, rtol=2e-3), \
        float(jnp.max(jnp.abs(out - ref_bf16)))

    # Loose check against the full-f32 semantics of the original module.
    ref_f32 = agcn_net_reference_f32(a_hat, features, params)
    assert jnp.allclose(out, ref_f32, atol=1e-1, rtol=1e-1), \
        float(jnp.max(jnp.abs(out - ref_f32)))

    print("KERNEL_OK")
</pallas_src>

<mosaic_0001>
module attributes {stable_mosaic.version = 11 : i64} {
  func.func @agcn_kernel(%arg0: i32, %arg1: memref<2xf32, #tpu.memory_space<smem>>, %arg2: memref<128x128xbf16, #tpu.memory_space<vmem>>, %arg3: memref<128x128xbf16, #tpu.memory_space<vmem>>, %arg4: memref<1x128x128xbf16, #tpu.memory_space<vmem>>, %arg5: memref<128x128xbf16, #tpu.memory_space<vmem>>, %arg6: memref<128x128xbf16, #tpu.memory_space<any>>, %arg7: memref<128x128xf32, #tpu.memory_space<vmem>>, %arg8: memref<128x128xbf16, #tpu.memory_space<vmem>>, %arg9: memref<128x128xbf16, #tpu.memory_space<vmem>>, %arg10: memref<128x128xf32, #tpu.memory_space<vmem>>, %arg11: memref<!tpu.dma_semaphore, #tpu.memory_space<semaphore_mem>>) attributes {dimension_semantics = [#tpu.dimension_semantics<arbitrary>], iteration_bounds = array<i64: 2>, scalar_prefetch = 1 : i64, scratch_operands = 4 : i64, tpu.core_type = #tpu.core_type<tc>, window_params = [{pipeline_mode = #tpu.pipeline_mode<synchronous>, transform_indices = @transform_0, window_bounds = array<i64: 128, 128>}, {pipeline_mode = #tpu.pipeline_mode<synchronous>, transform_indices = @transform_1, window_bounds = array<i64: 128, 128>}, {transform_indices = @transform_2, window_bounds = array<i64: 1, 128, 128>}, {pipeline_mode = #tpu.pipeline_mode<synchronous>, transform_indices = @transform_3, window_bounds = array<i64: 128, 128>}, {}, {pipeline_mode = #tpu.pipeline_mode<synchronous>, transform_indices = @transform_5, window_bounds = array<i64: 128, 128>}]} {
    %c0_i32 = arith.constant 0 : i32
    %0 = arith.cmpi eq, %arg0, %c0_i32 : i32
    %1 = arith.extui %0 : i1 to i32
    %c0_i32_0 = arith.constant 0 : i32
    %2 = arith.cmpi ne, %1, %c0_i32_0 : i32
    scf.if %2 {
      tpu.enqueue_dma source(%arg6 : memref<128x128xbf16, #tpu.memory_space<any>>) target(%arg8 : memref<128x128xbf16, #tpu.memory_space<vmem>>) target_semaphore(%arg11 : memref<!tpu.dma_semaphore, #tpu.memory_space<semaphore_mem>>)
      %c0_15 = arith.constant 0 : index
      %c0_16 = arith.constant 0 : index
      %26 = vector.load %arg2[%c0_15, %c0_16] : memref<128x128xbf16, #tpu.memory_space<vmem>>, vector<128x128xbf16>
      %c0_17 = arith.constant 0 : index
      %c0_18 = arith.constant 0 : index
      %27 = vector.load %arg3[%c0_17, %c0_18] : memref<128x128xbf16, #tpu.memory_space<vmem>>, vector<128x128xbf16>
      %cst_19 = arith.constant dense<0.000000e+00> : vector<128x128xf32>
      %28 = tpu.matmul %26, %27, %cst_19 {dimension_numbers = #tpu.dot_dimension_numbers<[1], [0], [0], [1], [0, 0, 1, 1], [], []>} : vector<128x128xbf16>, vector<128x128xbf16>, vector<128x128xf32> -> vector<128x128xf32>
      %cst_20 = arith.constant 0.000000e+00 : f32
      %29 = vector.broadcast %cst_20 : f32 to vector<128x128xf32>
      %30 = arith.maximumf %28, %29 : vector<128x128xf32>
      %31 = arith.truncf %30 : vector<128x128xf32> to vector<128x128xbf16>
      %c0_21 = arith.constant 0 : index
      %c0_22 = arith.constant 0 : index
      %32 = vector.load %arg9[%c0_21, %c0_22] : memref<128x128xbf16, #tpu.memory_space<vmem>>, vector<128x128xbf16>
      tpu.vector_store %arg9[%c0_21, %c0_22], %31 {strides = array<i32>} : memref<128x128xbf16, #tpu.memory_space<vmem>>, vector<128x128xbf16>,
      %c0_23 = arith.constant 0 : index
      %c0_24 = arith.constant 0 : index
      %33 = vector.load %arg10[%c0_23, %c0_24] : memref<128x128xf32, #tpu.memory_space<vmem>>, vector<128x128xf32>
      tpu.vector_store %arg10[%c0_23, %c0_24], %30 {strides = array<i32>} : memref<128x128xf32, #tpu.memory_space<vmem>>, vector<128x128xf32>,
      tpu.wait_dma2 semaphore(%arg11 : memref<!tpu.dma_semaphore, #tpu.memory_space<semaphore_mem>>) src(%arg6 : memref<128x128xbf16, #tpu.memory_space<any>>) dst(%arg8 : memref<128x128xbf16, #tpu.memory_space<vmem>>)
    } else {
    }
    %3 = arith.index_cast %arg0 : i32 to index
    %4 = memref.load %arg1[%3] : memref<2xf32, #tpu.memory_space<smem>>
    %c0 = arith.constant 0 : index
    %c0_1 = arith.constant 0 : index
    %5 = vector.load %arg8[%c0, %c0_1] : memref<128x128xbf16, #tpu.memory_space<vmem>>, vector<128x128xbf16>
    %c0_2 = arith.constant 0 : index
    %c0_3 = arith.constant 0 : index
    %6 = vector.load %arg9[%c0_2, %c0_3] : memref<128x128xbf16, #tpu.memory_space<vmem>>, vector<128x128xbf16>
    %cst = arith.constant dense<0.000000e+00> : vector<128x128xf32>
    %7 = tpu.matmul %5, %6, %cst {dimension_numbers = #tpu.dot_dimension_numbers<[1], [0], [0], [1], [0, 0, 1, 1], [], []>} : vector<128x128xbf16>, vector<128x128xbf16>, vector<128x128xf32> -> vector<128x128xf32>
    %8 = vector.broadcast %4 : f32 to vector<128x128xf32>
    %9 = arith.mulf %8, %7 : vector<128x128xf32>
    %cst_4 = arith.constant 1.000000e+00 : f32
    %10 = arith.subf %cst_4, %4 : f32
    %c0_5 = arith.constant 0 : index
    %c0_6 = arith.constant 0 : index
    %11 = vector.load %arg10[%c0_5, %c0_6] : memref<128x128xf32, #tpu.memory_space<vmem>>, vector<128x128xf32>
    %12 = vector.broadcast %10 : f32 to vector<128x128xf32>
    %13 = arith.mulf %12, %11 : vector<128x128xf32>
    %14 = arith.addf %9, %13 : vector<128x128xf32>
    %15 = arith.truncf %14 : vector<128x128xf32> to vector<128x128xbf16>
    %c0_7 = arith.constant 0 : index
    %c0_8 = arith.constant 0 : index
    %c0_9 = arith.constant 0 : index
    %16 = vector.load %arg4[%c0_7, %c0_8, %c0_9] : memref<1x128x128xbf16, #tpu.memory_space<vmem>>, vector<1x128x128xbf16>
    %17 = vector.shape_cast %16 : vector<1x128x128xbf16> to vector<128x128xbf16>
    %cst_10 = arith.constant dense<0.000000e+00> : vector<128x128xf32>
    %18 = tpu.matmul %15, %17, %cst_10 {dimension_numbers = #tpu.dot_dimension_numbers<[1], [0], [0], [1], [0, 0, 1, 1], [], []>} : vector<128x128xbf16>, vector<128x128xbf16>, vector<128x128xf32> -> vector<128x128xf32>
    %cst_11 = arith.constant 0.000000e+00 : f32
    %19 = vector.broadcast %cst_11 : f32 to vector<128x128xf32>
    %20 = arith.maximumf %18, %19 : vector<128x128xf32>
    %21 = arith.truncf %20 : vector<128x128xf32> to vector<128x128xbf16>
    %c0_12 = arith.constant 0 : index
    %c0_13 = arith.constant 0 : index
    %22 = vector.load %arg9[%c0_12, %c0_13] : memref<128x128xbf16, #tpu.memory_space<vmem>>, vector<128x128xbf16>
    tpu.vector_store %arg9[%c0_12, %c0_13], %21 {strides = array<i32>} : memref<128x128xbf16, #tpu.memory_space<vmem>>, vector<128x128xbf16>,
    %c1_i32 = arith.constant 1 : i32
    %23 = arith.cmpi eq, %arg0, %c1_i32 : i32
    %24 = arith.extui %23 : i1 to i32
    %c0_i32_14 = arith.constant 0 : i32
    %25 = arith.cmpi ne, %24, %c0_i32_14 : i32
    scf.if %25 {
      %c0_15 = arith.constant 0 : index
      %c0_16 = arith.constant 0 : index
      %26 = vector.load %arg9[%c0_15, %c0_16] : memref<128x128xbf16, #tpu.memory_space<vmem>>, vector<128x128xbf16>
      %c0_17 = arith.constant 0 : index
      %c0_18 = arith.constant 0 : index
      %27 = vector.load %arg5[%c0_17, %c0_18] : memref<128x128xbf16, #tpu.memory_space<vmem>>, vector<128x128xbf16>
      %cst_19 = arith.constant dense<0.000000e+00> : vector<128x128xf32>
      %28 = tpu.matmul %26, %27, %cst_19 {dimension_numbers = #tpu.dot_dimension_numbers<[1], [0], [0], [1], [0, 0, 1, 1], [], []>} : vector<128x128xbf16>, vector<128x128xbf16>, vector<128x128xf32> -> vector<128x128xf32>
      %c0_20 = arith.constant 0 : index
      %c0_21 = arith.constant 0 : index
      %29 = vector.load %arg7[%c0_20, %c0_21] : memref<128x128xf32, #tpu.memory_space<vmem>>, vector<128x128xf32>
      tpu.vector_store %arg7[%c0_20, %c0_21], %28 {strides = array<i32>} : memref<128x128xf32, #tpu.memory_space<vmem>>, vector<128x128xf32>,
    } else {
    }
    return
  }
  func.func @transform_0(%arg0: i32, %arg1: memref<2xf32, #tpu.memory_space<smem>>) -> (i32, i32) {
    %c0_i32 = arith.constant 0 : i32
    %c0_i32_0 = arith.constant 0 : i32
    %c0_i32_1 = arith.constant 0 : i32
    return %c0_i32, %c0_i32_0 : i32, i32
  }
  func.func @transform_1(%arg0: i32, %arg1: memref<2xf32, #tpu.memory_space<smem>>) -> (i32, i32) {
    %c0_i32 = arith.constant 0 : i32
    %c0_i32_0 = arith.constant 0 : i32
    %c0_i32_1 = arith.constant 0 : i32
    return %c0_i32, %c0_i32_0 : i32, i32
  }
  func.func @transform_2(%arg0: i32, %arg1: memref<2xf32, #tpu.memory_space<smem>>) -> (i32, i32, i32) {
    %c0_i32 = arith.constant 0 : i32
    %c0_i32_0 = arith.constant 0 : i32
    %c0_i32_1 = arith.constant 0 : i32
    return %arg0, %c0_i32, %c0_i32_0 : i32, i32, i32
  }
  func.func @transform_3(%arg0: i32, %arg1: memref<2xf32, #tpu.memory_space<smem>>) -> (i32, i32) {
    %c0_i32 = arith.constant 0 : i32
    %c0_i32_0 = arith.constant 0 : i32
    %c0_i32_1 = arith.constant 0 : i32
    return %c0_i32, %c0_i32_0 : i32, i32
  }
  func.func @transform_5(%arg0: i32, %arg1: memref<2xf32, #tpu.memory_space<smem>>) -> (i32, i32) {
    %c0_i32 = arith.constant 0 : i32
    %c0_i32_0 = arith.constant 0 : i32
    %c0_i32_1 = arith.constant 0 : i32
    return %c0_i32, %c0_i32_0 : i32, i32
  }
}

</mosaic_0001>

<llo_original>
// kernel: agcn_net_forward.1
$region0: #{agcn_net_forward.1}
  #allocation0 [shape = 'u32[]', space=smem, size = 0x4, offset = 0x4, fixed_abs, tag = 'smem constant byte address 0x4 - core index']
  #allocation1 [shape = 'u32[144,128]{1,0:T(1,128)}', space=vmem, size = 0x12000, scoped, tag = 'internal scratch']
  #allocation2 [shape = 'bf16[128,128]{1,0:T(8,128)(2,1)}', space=vmem, size = 0x8000, scoped, tag = 'scratch operand']
  #allocation3 [shape = 'bf16[128,128]{1,0:T(8,128)(2,1)}', space=vmem, size = 0x8000, scoped, tag = 'scratch operand']
  #allocation4 [shape = 'f32[128,128]{1,0:T(8,128)}', space=vmem, size = 0x10000, scoped, tag = 'scratch operand']
  #allocation5 [shape = 's32[1]{0}', space=sflag, size = 0x4, scoped, tag = 'scratch operand']
  #allocation6 [shape = 's32[1]{0}', space=sflag, size = 0x4, scoped, tag = 'scoped memory for agcn_net_forward.1']
  #allocation7 [shape = 'u8[512]{0}', space=smem, size = 0x200, scoped, tag = 'prefetched SMEM operand 0']
  #allocation8 [shape = 's32[]', space=sflag, size = 0x4, offset = 0, fixed_abs, tag = 'sflag constant byte address 0x0 - dummy sync flag']
  %s0 = inlined_call_operand.vmem [shape: f32[2], index: 0, kind: input, shape index: {}]
  %s1 = inlined_call_operand.vmem [shape: bf16[128,128], index: 1, kind: input, shape index: {}]
  %s2 = inlined_call_operand.vmem [shape: bf16[128,128], index: 2, kind: input, shape index: {}]
  %s3 = inlined_call_operand.vmem [shape: bf16[2,128,128], index: 3, kind: input, shape index: {}]
  %s4 = inlined_call_operand.vmem [shape: bf16[128,128], index: 4, kind: input, shape index: {}]
  %s5 = inlined_call_operand.vmem [shape: bf16[128,128], index: 5, kind: input, shape index: {}]
  %s6 = inlined_call_operand.vmem [shape: f32[128,128], index: 6, kind: output, shape index: {}]
  %s7 = sld [smem:[#allocation0]]
  $region91: #{agcn_net_forward.1} parent=0
    _
  %s9 = ssub.s32 1, %s7
  %s10 = scalar_select 0, %s9, %s7
  %s11 = sshll.u32 %s0, 4
  %s12 = int_to_ptr.vmem [resolvable:$true] %s11
  %14 = dma.vmem_to_smem %s12, 16, [#allocation7], [#allocation6]
  %15 = dma.done [#allocation6], 16
  %16 = sfence
  loop: start=0, step=1, limit=4
  $region2: #{agcn_net_forward.1} parent=0 // loop_pre_header
    _
  $region3: #{agcn_net_forward.1} parent=0 // loop_header
    %s18 = sphi 0, %s22
    %p19 = scmp.ge.s32.totalorder %s18, 4
    %s26 = sphi 0, %s26
    %s28 = sphi 0, %s26
    %s29 = sphi 0, %s28
    %s43 = sphi 0, %s29
    %s47 = sphi 0, %s47
    %s49 = sphi 0, %s47
    %s50 = sphi 0, %s49
    %s64 = sphi 0, %s50
    %s70 = sphi 0, %s72
    %s73 = sphi 0, %s70
    %s74 = sphi 0, %s73
    %s90 = sphi 0, %s74
    %s94 = sphi 0, %s94
    %s96 = sphi 0, %s94
    %s97 = sphi 0, %s96
    %s111 = sphi 0, %s97
    %s115 = sphi 0, %s115
    %s117 = sphi 0, %s115
    %s118 = sphi 0, %s117
    %s132 = sphi 0, %s118
  $region4: #{agcn_net_forward.1} parent=0 // loop_header_branch
    %21 = sbr.rel (%p19) target = $region8
  $region5: #{agcn_net_forward.1} parent=0 // loop_body
    %s23 = ssub.s32 %s18, 1
    %s24 = ssub.s32 %s18, 2
    %s25 = sadd.s32 %s18, 1
    %s27 = sadd.s32 %s26, 1
    %p30 = scmp.eq.s32.totalorder %s18, 1
    %p31 = scmp.ne.s32.totalorder %s26, %s28
    %p32 = scmp.eq.s32.totalorder %s18, 0
    %p33 = por %p31, %p32
    %p34 = scmp.ne.s32.totalorder %s26, %s28
    %p35 = scmp.eq.s32.totalorder %s23, 1
    %p36 = por %p34, %p35
    %p37 = scmp.ne.s32.totalorder %s28, %s29
    %p38 = scmp.eq.s32.totalorder %s23, 0
    %p39 = por %p37, %p38
    %p40 = scmp.ne.s32.totalorder %s28, %s29
    %p41 = scmp.eq.s32.totalorder %s24, 1
    %p42 = por %p40, %p41
    %p44 = scmp.ne.s32.totalorder %s29, %s43
    %p45 = scmp.eq.s32.totalorder %s24, 0
    %p46 = por %p44, %p45
    %s48 = sadd.s32 %s47, 1
    %p51 = scmp.eq.s32.totalorder %s18, 1
    %p52 = scmp.ne.s32.totalorder %s47, %s49
    %p53 = scmp.eq.s32.totalorder %s18, 0
    %p54 = por %p52, %p53
    %p55 = scmp.ne.s32.totalorder %s47, %s49
    %p56 = scmp.eq.s32.totalorder %s23, 1
    %p57 = por %p55, %p56
    %p58 = scmp.ne.s32.totalorder %s49, %s50
    %p59 = scmp.eq.s32.totalorder %s23, 0
    %p60 = por %p58, %p59
    %p61 = scmp.ne.s32.totalorder %s49, %s50
    %p62 = scmp.eq.s32.totalorder %s24, 1
    %p63 = por %p61, %p62
    %p65 = scmp.ne.s32.totalorder %s50, %s64
    %p66 = scmp.eq.s32.totalorder %s24, 0
    %p67 = por %p65, %p66
    %s68 = ssub.s32 %s18, %s25
    %p69 = scmp.eq.s32.totalorder %s68, 0
    %s71 = sadd.s32 %s70, 1
    %s72 = scalar_select %p69, %s70, %s71
    %p75 = pneg %p69
    %p76 = scmp.eq.s32.totalorder %s18, 1
    %p77 = por %p75, %p76
    %p78 = scmp.ne.s32.totalorder %s70, %s73
    %p79 = scmp.eq.s32.totalorder %s18, 0
    %p80 = por %p78, %p79
    %p81 = scmp.ne.s32.totalorder %s70, %s73
    %p82 = scmp.eq.s32.totalorder %s23, 1
    %p83 = por %p81, %p82
    %p84 = scmp.ne.s32.totalorder %s73, %s74
    %p85 = scmp.eq.s32.totalorder %s23, 0
    %p86 = por %p84, %p85
    %p87 = scmp.ne.s32.totalorder %s73, %s74
    %p88 = scmp.eq.s32.totalorder %s24, 1
    %p89 = por %p87, %p88
    %p91 = scmp.ne.s32.totalorder %s74, %s90
    %p92 = scmp.eq.s32.totalorder %s24, 0
    %p93 = por %p91, %p92
    %s95 = sadd.s32 %s94, 1
    %p98 = scmp.eq.s32.totalorder %s18, 1
    %p99 = scmp.ne.s32.totalorder %s94, %s96
    %p100 = scmp.eq.s32.totalorder %s18, 0
    %p101 = por %p99, %p100
    %p102 = scmp.ne.s32.totalorder %s94, %s96
    %p103 = scmp.eq.s32.totalorder %s23, 1
    %p104 = por %p102, %p103
    %p105 = scmp.ne.s32.totalorder %s96, %s97
    %p106 = scmp.eq.s32.totalorder %s23, 0
    %p107 = por %p105, %p106
    %p108 = scmp.ne.s32.totalorder %s96, %s97
    %p109 = scmp.eq.s32.totalorder %s24, 1
    %p110 = por %p108, %p109
    %p112 = scmp.ne.s32.totalorder %s97, %s111
    %p113 = scmp.eq.s32.totalorder %s24, 0
    %p114 = por %p112, %p113
    %s116 = sadd.s32 %s115, 1
    %p119 = scmp.eq.s32.totalorder %s18, 1
    %p120 = scmp.ne.s32.totalorder %s115, %s117
    %p121 = scmp.eq.s32.totalorder %s18, 0
    %p122 = por %p120, %p121
    %p123 = scmp.ne.s32.totalorder %s115, %s117
    %p124 = scmp.eq.s32.totalorder %s23, 1
    %p125 = por %p123, %p124
    %p126 = scmp.ne.s32.totalorder %s117, %s118
    %p127 = scmp.eq.s32.totalorder %s23, 0
    %p128 = por %p126, %p127
    %p129 = scmp.ne.s32.totalorder %s117, %s118
    %p130 = scmp.eq.s32.totalorder %s24, 1
    %p131 = por %p129, %p130
    %p133 = scmp.ne.s32.totalorder %s118, %s132
    %p134 = scmp.eq.s32.totalorder %s24, 0
    %p135 = por %p133, %p134
    %p136 = scmp.le.s32.totalorder 1, %s18
    %p137 = scmp.lt.s32.totalorder %s18, 3
    %p138 = pnand %p136, %p137
    %p139 = pneg %p138
    // Predicated region
    $region9: #{agcn_net_forward.1} parent=5 // pred_check
      _
    $region10: #{agcn_net_forward.1} parent=5 // pred_check_branch
      %141 = sbr.rel (%p138) target = $region12
    $region11: #{agcn_net_forward.1} parent=5 // pred_region
      %s142 = ssub.s32 %s18, 1
      // Predicated region
      $region13: #{agcn_net_forward.1} parent=11 // pred_check
        %p143 = pneg %p39
      $region14: #{agcn_net_forward.1} parent=11 // pred_check_branch
        %145 = sbr.rel (%p143) target = $region16
      $region15: #{agcn_net_forward.1} parent=11 // pred_region
        _
      $region16: #{agcn_net_forward.1} parent=11 // pred_fallthru
        _
      // Predicated region
      $region17: #{agcn_net_forward.1} parent=11 // pred_check
        %p146 = pneg %p60
      $region18: #{agcn_net_forward.1} parent=11 // pred_check_branch
        %148 = sbr.rel (%p146) target = $region20
      $region19: #{agcn_net_forward.1} parent=11 // pred_region
        _
      $region20: #{agcn_net_forward.1} parent=11 // pred_fallthru
        _
      // Predicated region
      $region21: #{agcn_net_forward.1} parent=11 // pred_check
        %p149 = pneg %p107
      $region22: #{agcn_net_forward.1} parent=11 // pred_check_branch
        %151 = sbr.rel (%p149) target = $region24
      $region23: #{agcn_net_forward.1} parent=11 // pred_region
        _
      $region24: #{agcn_net_forward.1} parent=11 // pred_fallthru
        _
    $region12: #{agcn_net_forward.1} parent=5 // pred_fallthru
      _
    %p152 = scmp.lt.s32.totalorder %s18, 2
    // Predicated region
    $region25: #{agcn_net_forward.1} parent=5 // pred_check
      %p153 = pneg %p152
    $region26: #{agcn_net_forward.1} parent=5 // pred_check_branch
      %155 = sbr.rel (%p153) target = $region28
    $region27: #{agcn_net_forward.1} parent=5 // pred_region
      // Predicated region
      $region29: #{agcn_net_forward.1} parent=27 // pred_check
        %p156 = pneg %p80
      $region30: #{agcn_net_forward.1} parent=27 // pred_check_branch
        %158 = sbr.rel (%p156) target = $region32
      $region31: #{agcn_net_forward.1} parent=27 // pred_region
        %p159 = scmp.lt.s32.totalorder %s18, 1
        %s160 = scalar_select %p159, %s18, 1
        %s161 = smul.addr %s160, 16
        %s162 = smul.addr %s161, 4
        %s163 = scalar_lea.vmem %s3, %s162
      $region32: #{agcn_net_forward.1} parent=27 // pred_fallthru
        _
    $region28: #{agcn_net_forward.1} parent=5 // pred_fallthru
      _
    %p164 = scmp.le.s32.totalorder 1, %s18
    %p165 = scmp.lt.s32.totalorder %s18, 3
    %p166 = pnand %p164, %p165
    %p167 = pneg %p166
    // Predicated region
    $region33: #{agcn_net_forward.1} parent=5 // pred_check
      _
    $region34: #{agcn_net_forward.1} parent=5 // pred_check_branch
      %169 = sbr.rel (%p166) target = $region36
    $region35: #{agcn_net_forward.1} parent=5 // pred_region
      %s170 = ssub.s32 %s18, 1
      %p171 = pneg %p39
      %p172 = pneg %p36
      %p173 = pneg %p60
      %p174 = pneg %p57
      %p175 = scmp.lt.s32.totalorder %s23, 1
      %s176 = scalar_select %p175, %s23, 1
      %s177 = smul.addr %s176, 16
      %s178 = smul.addr %s177, 4
      %s179 = scalar_lea.vmem %s3, %s178
      %p180 = pneg %p86
      %p181 = pneg %p83
      %p182 = pneg %p107
      %p183 = pneg %p104
      %p184 = pneg %p128
      %p185 = pneg %p125
      %p186 = scmp.lt.s32.totalorder %s23, 1
      %s187 = scalar_select %p186, %s23, 1
      %s188 = smul.addr %s187, 16
      %s189 = smul.addr %s188, 4
      %s190 = scalar_lea.vmem %s3, %s189
      %p192 = scmp.eq.s32.totalorder %s23, 0
      // Predicated region
      $region37: #{agcn_net_forward.1} parent=35 // pred_check
        %p193 = pneg %p192
      $region38: #{agcn_net_forward.1} parent=35 // pred_check_branch
        %195 = sbr.rel (%p193) target = $region40
      $region39: #{agcn_net_forward.1} parent=35 // pred_region
        %p197 = scmp.lt.u32.totalorder 64, 8
        %p198 = pneg %p197
        // Predicated region
        $region41: #{agcn_net_forward.1} parent=39 // pred_check
          _
        $region42: #{agcn_net_forward.1} parent=39 // pred_check_branch
          %200 = sbr.rel (%p197) target = $region44
        $region43: #{agcn_net_forward.1} parent=39 // pred_region
          %s216 = sand.u32 64, 7
          %p217 = scmp.eq.s32.totalorder %s216, 0
          // Predicated region
          $region56: #{agcn_net_forward.1} parent=43 // pred_check
            %p218 = pneg %p217
          $region57: #{agcn_net_forward.1} parent=43 // pred_check_branch
            %220 = sbr.rel (%p218) target = $region59
          $region58: #{agcn_net_forward.1} parent=43 // pred_region
            loop: start=0, step=1, limit=1
            $region60: #{agcn_net_forward.1} parent=58 // loop_pre_header
              _
            $region61: #{agcn_net_forward.1} parent=58 // loop_header
              %s222 = sphi 0, %s226
              %p223 = scmp.ge.s32.totalorder %s222, 1
              %s227 = sphi %s5, %s5
              %s228 = sphi [#allocation2], [#allocation2]
            $region62: #{agcn_net_forward.1} parent=58 // loop_header_branch
              %225 = sbr.rel (%p223) target = $region66
            $region63: #{agcn_net_forward.1} parent=58 // loop_body
              %v229 = vld [vmem:[%s227] sm:$0xff]
              %230 = vst [vmem:[%s228] sm:$0xff] %v229
              %v231 = vld [vmem:[%s227 + $0x8] sm:$0xff]
              %232 = vst [vmem:[%s228 + $0x8] sm:$0xff] %v231
              %v233 = vld [vmem:[%s227 + $0x10] sm:$0xff]
              %234 = vst [vmem:[%s228 + $0x10] sm:$0xff] %v233
              %v235 = vld [vmem:[%s227 + $0x18] sm:$0xff]
              %236 = vst [vmem:[%s228 + $0x18] sm:$0xff] %v235
              %v237 = vld [vmem:[%s227 + $0x20] sm:$0xff]
              %238 = vst [vmem:[%s228 + $0x20] sm:$0xff] %v237
              %v239 = vld [vmem:[%s227 + $0x28] sm:$0xff]
              %240 = vst [vmem:[%s228 + $0x28] sm:$0xff] %v239
              %v241 = vld [vmem:[%s227 + $0x30] sm:$0xff]
              %242 = vst [vmem:[%s228 + $0x30] sm:$0xff] %v241
              %v243 = vld [vmem:[%s227 + $0x38] sm:$0xff]
              %244 = vst [vmem:[%s228 + $0x38] sm:$0xff] %v243
            $region64: #{agcn_net_forward.1} parent=58 // loop_footer
              %s226 = sadd.s32 1, %s222
            $region65: #{agcn_net_forward.1} parent=58 // loop_footer_branch
              %221 = sbr.rel target = $region61
            $region66: #{agcn_net_forward.1} parent=58 // loop_exit
              _
          $region59: #{agcn_net_forward.1} parent=43 // pred_fallthru
            _
          %p245 = pneg %p217
          // Predicated region
          $region67: #{agcn_net_forward.1} parent=43 // pred_check
            _
          $region68: #{agcn_net_forward.1} parent=43 // pred_check_branch
            %247 = sbr.rel (%p217) target = $region70
          $region69: #{agcn_net_forward.1} parent=43 // pred_region
            %s248 = sand.u32 64, 7
          $region70: #{agcn_net_forward.1} parent=43 // pred_fallthru
            _
        $region44: #{agcn_net_forward.1} parent=39 // pred_fallthru
          _
        // Predicated region
        $region45: #{agcn_net_forward.1} parent=39 // pred_check
          %p201 = pneg %p197
        $region46: #{agcn_net_forward.1} parent=39 // pred_check_branch
          %203 = sbr.rel (%p201) target = $region48
        $region47: #{agcn_net_forward.1} parent=39 // pred_region
          %s204 = sshll.u32 1, 64
          %s205 = ssub.s32 %s204, 1
          loop: start=0, step=1, limit=1
          $region49: #{agcn_net_forward.1} parent=47 // loop_pre_header
            _
          $region50: #{agcn_net_forward.1} parent=47 // loop_header
            %s207 = sphi 0, %s211
            %p208 = scmp.ge.s32.totalorder %s207, 1
            %s212 = sphi %s5, %s5
            %s213 = sphi [#allocation2], [#allocation2]
          $region51: #{agcn_net_forward.1} parent=47 // loop_header_branch
            %210 = sbr.rel (%p208) target = $region55
          $region52: #{agcn_net_forward.1} parent=47 // loop_body
            %v214 = vld [vmem:[%s212] sm:%s205]
            %215 = vst [vmem:[%s213] sm:%s205] %v214
          $region53: #{agcn_net_forward.1} parent=47 // loop_footer
            %s211 = sadd.s32 1, %s207
          $region54: #{agcn_net_forward.1} parent=47 // loop_footer_branch
            %206 = sbr.rel target = $region50
          $region55: #{agcn_net_forward.1} parent=47 // loop_exit
            _
        $region48: #{agcn_net_forward.1} parent=39 // pred_fallthru
          _
        // Predicated region
        $region71: #{agcn_net_forward.1} parent=39 // pred_check
          _
        $region72: #{agcn_net_forward.1} parent=39 // pred_check_branch
          %251 = sbr.rel (0) target = $region74
        $region73: #{agcn_net_forward.1} parent=39 // pred_region
          %252 = vsyncadd [#allocation5], 1024
        $region74: #{agcn_net_forward.1} parent=39 // pred_fallthru
          _
        %v253 = vld [vmem:[%s1] sm:$0xf]
        %v254 = vld [vmem:[%s1 + $0x4] sm:$0xf]
        %v255 = vld [vmem:[%s1 + $0x8] sm:$0xf]
        %v256 = vld [vmem:[%s1 + $0xc] sm:$0xf]
        %v257 = vld [vmem:[%s1 + $0x10] sm:$0xf]
        %v258 = vld [vmem:[%s1 + $0x14] sm:$0xf]
        %v259 = vld [vmem:[%s1 + $0x18] sm:$0xf]
        %v260 = vld [vmem:[%s1 + $0x1c] sm:$0xf]
        %v261 = vld [vmem:[%s1 + $0x20] sm:$0xf]
        %v262 = vld [vmem:[%s1 + $0x24] sm:$0xf]
        %v263 = vld [vmem:[%s1 + $0x28] sm:$0xf]
        %v264 = vld [vmem:[%s1 + $0x2c] sm:$0xf]
        %v265 = vld [vmem:[%s1 + $0x30] sm:$0xf]
        %v266 = vld [vmem:[%s1 + $0x34] sm:$0xf]
        %v267 = vld [vmem:[%s1 + $0x38] sm:$0xf]
        %v268 = vld [vmem:[%s1 + $0x3c] sm:$0xf]
        %v269 = vld [vmem:[%s2] sm:$0xf]
        %v270 = vld [vmem:[%s2 + $0x4] sm:$0xf]
        %v271 = vld [vmem:[%s2 + $0x8] sm:$0xf]
        %v272 = vld [vmem:[%s2 + $0xc] sm:$0xf]
        %v273 = vld [vmem:[%s2 + $0x10] sm:$0xf]
        %v274 = vld [vmem:[%s2 + $0x14] sm:$0xf]
        %v275 = vld [vmem:[%s2 + $0x18] sm:$0xf]
        %v276 = vld [vmem:[%s2 + $0x1c] sm:$0xf]
        %v277 = vld [vmem:[%s2 + $0x20] sm:$0xf]
        %v278 = vld [vmem:[%s2 + $0x24] sm:$0xf]
        %v279 = vld [vmem:[%s2 + $0x28] sm:$0xf]
        %v280 = vld [vmem:[%s2 + $0x2c] sm:$0xf]
        %v281 = vld [vmem:[%s2 + $0x30] sm:$0xf]
        %v282 = vld [vmem:[%s2 + $0x34] sm:$0xf]
        %v283 = vld [vmem:[%s2 + $0x38] sm:$0xf]
        %v284 = vld [vmem:[%s2 + $0x3c] sm:$0xf]
        %v301 = vunpack.c.l.b16 %v253
        %v302 = vunpack.c.l.b16 %v254
        %v303 = vunpack.c.l.b16 %v255
        %v304 = vunpack.c.l.b16 %v256
        %v305 = vunpack.c.l.b16 %v257
        %v306 = vunpack.c.l.b16 %v258
        %v307 = vunpack.c.l.b16 %v259
        %v308 = vunpack.c.l.b16 %v260
        %v309 = vunpack.c.l.b16 %v261
        %v310 = vunpack.c.l.b16 %v262
        %v311 = vunpack.c.l.b16 %v263
        %v312 = vunpack.c.l.b16 %v264
        %v313 = vunpack.c.l.b16 %v265
        %v314 = vunpack.c.l.b16 %v266
        %v315 = vunpack.c.l.b16 %v267
        %v316 = vunpack.c.l.b16 %v268
        %v317 = vpack.c.b16 %v302, %v301
        %v318 = vpack.c.b16 %v304, %v303
        %v319 = vpack.c.b16 %v306, %v305
        %v320 = vpack.c.b16 %v308, %v307
        %v321 = vpack.c.b16 %v310, %v309
        %v322 = vpack.c.b16 %v312, %v311
        %v323 = vpack.c.b16 %v314, %v313
        %v324 = vpack.c.b16 %v316, %v315
        %v349 = vunpack.c.l.b16 %v269
        %v350 = vunpack.c.l.b16 %v270
        %v351 = vunpack.c.l.b16 %v271
        %v352 = vunpack.c.l.b16 %v272
        %v353 = vunpack.c.l.b16 %v273
        %v354 = vunpack.c.l.b16 %v274
        %v355 = vunpack.c.l.b16 %v275
        %v356 = vunpack.c.l.b16 %v276
        %v357 = vunpack.c.l.b16 %v277
        %v358 = vunpack.c.l.b16 %v278
        %v359 = vunpack.c.l.b16 %v279
        %v360 = vunpack.c.l.b16 %v280
        %v361 = vunpack.c.l.b16 %v281
        %v362 = vunpack.c.l.b16 %v282
        %v363 = vunpack.c.l.b16 %v283
        %v364 = vunpack.c.l.b16 %v284
        %v365 = vpack.c.b16 %v350, %v349
        %v366 = vpack.c.b16 %v352, %v351
        %v367 = vpack.c.b16 %v354, %v353
        %v368 = vpack.c.b16 %v356, %v355
        %v369 = vpack.c.b16 %v358, %v357
        %v370 = vpack.c.b16 %v360, %v359
        %v371 = vpack.c.b16 %v362, %v361
        %v372 = vpack.c.b16 %v364, %v363
        %381 = vmatprep.subr.bf16.mxu0 0
        %382 = vmatpush1.bf16.msra.mxu0 %v372
        %383 = vmatprep.subr.bf16.mxu0 0
        %384 = vmatpush1.bf16.msra.mxu0 %v371
        %385 = vmatprep.subr.bf16.mxu0 0
        %386 = vmatpush1.bf16.msra.mxu0 %v370
        %387 = vmatprep.subr.bf16.mxu0 0
        %388 = vmatpush1.bf16.msra.mxu0 %v369
        %389 = vmatprep.subr.bf16.mxu0 0
        %390 = vmatpush1.bf16.msra.mxu0 %v368
        %391 = vmatprep.subr.bf16.mxu0 0
        %392 = vmatpush1.bf16.msra.mxu0 %v367
        %393 = vmatprep.subr.bf16.mxu0 0
        %394 = vmatpush1.bf16.msra.mxu0 %v366
        %395 = vmatprep.subr.bf16.mxu0 0
        %396 = vmatpush1.bf16.msra.mxu0 %v365
        %397 = vmatprep.subr.bf16.mxu0 0
        %398 = vmatpush2.bf16.msra.mxu0 0
        %399 = vmatprep.subr.bf16.mxu0 0
        %400 = vmatpush2.bf16.msra.mxu0 0
        %401 = vmatprep.subr.bf16.mxu0 0
        %402 = vmatpush2.bf16.msra.mxu0 0
        %403 = vmatprep.subr.bf16.mxu0 0
        %404 = vmatpush2.bf16.msra.mxu0 0
        %405 = vmatprep.subr.bf16.mxu0 0
        %406 = vmatpush2.bf16.msra.mxu0 0
        %407 = vmatprep.subr.bf16.mxu0 0
        %408 = vmatpush2.bf16.msra.mxu0 0
        %409 = vmatprep.subr.bf16.mxu0 0
        %410 = vmatpush2.bf16.msra.mxu0 0
        %411 = vmatprep.subr.bf16.mxu0 0
        %412 = vmatpush2.bf16.msra.mxu0 0
        %413 = vmatprep.mubr.bf16.mxu0 0
        %414 = vmatmul.mubr.bf16.gmra.mxu0 %v317
        %v415 = vpop.f32.mrf.mxu0
        %v416 = vadd.f32 0.0, %v415
        %v417 = vpop.f32.mrf.mxu0
        %v418 = vpop.f32.mrf.mxu0
        %v419 = vadd.f32 0.0, %v418
        %v420 = vpop.f32.mrf.mxu0
        %421 = vmatprep.mubr.bf16.mxu0 0
        %422 = vmatmul.mubr.bf16.gmra.mxu0 %v318
        %v423 = vpop.f32.mrf.mxu0
        %v424 = vadd.f32 0.0, %v423
        %v425 = vpop.f32.mrf.mxu0
        %v426 = vpop.f32.mrf.mxu0
        %v427 = vadd.f32 0.0, %v426
        %v428 = vpop.f32.mrf.mxu0
        %429 = vmatprep.mubr.bf16.mxu0 0
        %430 = vmatmul.mubr.bf16.gmra.mxu0 %v319
        %v431 = vpop.f32.mrf.mxu0
        %v432 = vadd.f32 0.0, %v431
        %v433 = vpop.f32.mrf.mxu0
        %v434 = vpop.f32.mrf.mxu0
        %v435 = vadd.f32 0.0, %v434
        %v436 = vpop.f32.mrf.mxu0
        %437 = vmatprep.mubr.bf16.mxu0 0
        %438 = vmatmul.mubr.bf16.gmra.mxu0 %v320
        %v439 = vpop.f32.mrf.mxu0
        %v440 = vadd.f32 0.0, %v439
        %v441 = vpop.f32.mrf.mxu0
        %v442 = vpop.f32.mrf.mxu0
        %v443 = vadd.f32 0.0, %v442
        %v444 = vpop.f32.mrf.mxu0
        %445 = vmatprep.mubr.bf16.mxu0 0
        %446 = vmatmul.mubr.bf16.gmra.mxu0 %v321
        %v447 = vpop.f32.mrf.mxu0
        %v448 = vadd.f32 0.0, %v447
        %v449 = vpop.f32.mrf.mxu0
        %v450 = vpop.f32.mrf.mxu0
        %v451 = vadd.f32 0.0, %v450
        %v452 = vpop.f32.mrf.mxu0
        %453 = vmatprep.mubr.bf16.mxu0 0
        %454 = vmatmul.mubr.bf16.gmra.mxu0 %v322
        %v455 = vpop.f32.mrf.mxu0
        %v456 = vadd.f32 0.0, %v455
        %v457 = vpop.f32.mrf.mxu0
        %v458 = vpop.f32.mrf.mxu0
        %v459 = vadd.f32 0.0, %v458
        %v460 = vpop.f32.mrf.mxu0
        %461 = vmatprep.mubr.bf16.mxu0 0
        %462 = vmatmul.mubr.bf16.gmra.mxu0 %v323
        %v463 = vpop.f32.mrf.mxu0
        %v464 = vadd.f32 0.0, %v463
        %v465 = vpop.f32.mrf.mxu0
        %v466 = vpop.f32.mrf.mxu0
        %v467 = vadd.f32 0.0, %v466
        %v468 = vpop.f32.mrf.mxu0
        %469 = vmatprep.mubr.bf16.mxu0 0
        %470 = vmatmul.mubr.bf16.gmra.mxu0 %v324
        %v471 = vpop.f32.mrf.mxu0
        %v472 = vadd.f32 0.0, %v471
        %v473 = vpop.f32.mrf.mxu0
        %v474 = vpop.f32.mrf.mxu0
        %v475 = vadd.f32 0.0, %v474
        %v476 = vpop.f32.mrf.mxu0
        %477 = vdwg.mxu0
        %v478 = vmax.f32 %v416, 0.0
        %v479 = vmax.f32 %v419, 0.0
        %v480 = vmax.f32 %v424, 0.0
        %v481 = vmax.f32 %v427, 0.0
        %v482 = vmax.f32 %v432, 0.0
        %v483 = vmax.f32 %v435, 0.0
        %v484 = vmax.f32 %v440, 0.0
        %v485 = vmax.f32 %v443, 0.0
        %v486 = vmax.f32 %v448, 0.0
        %v487 = vmax.f32 %v451, 0.0
        %v488 = vmax.f32 %v456, 0.0
        %v489 = vmax.f32 %v459, 0.0
        %v490 = vmax.f32 %v464, 0.0
        %v491 = vmax.f32 %v467, 0.0
        %v492 = vmax.f32 %v472, 0.0
        %v493 = vmax.f32 %v475, 0.0
        %v494 = vpack.c.bf16 %v479, %v478
        %v495 = vpack.c.bf16 %v481, %v480
        %v496 = vpack.c.bf16 %v483, %v482
        %v497 = vpack.c.bf16 %v485, %v484
        %v498 = vpack.c.bf16 %v487, %v486
        %v499 = vpack.c.bf16 %v489, %v488
        %v500 = vpack.c.bf16 %v491, %v490
        %v501 = vpack.c.bf16 %v493, %v492
        %v510 = vunpack.c.l.b16 %v494
        %v511 = vunpack.c.h.b16 %v494
        %v512 = vunpack.c.l.b16 %v495
        %v513 = vunpack.c.h.b16 %v495
        %v514 = vunpack.c.l.b16 %v496
        %v515 = vunpack.c.h.b16 %v496
        %v516 = vunpack.c.l.b16 %v497
        %v517 = vunpack.c.h.b16 %v497
        %v518 = vunpack.c.l.b16 %v498
        %v519 = vunpack.c.h.b16 %v498
        %v520 = vunpack.c.l.b16 %v499
        %v521 = vunpack.c.h.b16 %v499
        %v522 = vunpack.c.l.b16 %v500
        %v523 = vunpack.c.h.b16 %v500
        %v524 = vunpack.c.l.b16 %v501
        %v525 = vunpack.c.h.b16 %v501
        %v526 = vpack.c.b16 %v510, %v510
        %v527 = vpack.c.b16 %v511, %v511
        %v528 = vpack.c.b16 %v512, %v512
        %v529 = vpack.c.b16 %v513, %v513
        %v530 = vpack.c.b16 %v514, %v514
        %v531 = vpack.c.b16 %v515, %v515
        %v532 = vpack.c.b16 %v516, %v516
        %v533 = vpack.c.b16 %v517, %v517
        %v534 = vpack.c.b16 %v518, %v518
        %v535 = vpack.c.b16 %v519, %v519
        %v536 = vpack.c.b16 %v520, %v520
        %v537 = vpack.c.b16 %v521, %v521
        %v538 = vpack.c.b16 %v522, %v522
        %v539 = vpack.c.b16 %v523, %v523
        %v540 = vpack.c.b16 %v524, %v524
        %v541 = vpack.c.b16 %v525, %v525
        %558 = vst [vmem:[#allocation3] sm:$0xf] %v526
        %559 = vst [vmem:[#allocation3 + $0x4] sm:$0xf] %v527
        %560 = vst [vmem:[#allocation3 + $0x8] sm:$0xf] %v528
        %561 = vst [vmem:[#allocation3 + $0xc] sm:$0xf] %v529
        %562 = vst [vmem:[#allocation3 + $0x10] sm:$0xf] %v530
        %563 = vst [vmem:[#allocation3 + $0x14] sm:$0xf] %v531
        %564 = vst [vmem:[#allocation3 + $0x18] sm:$0xf] %v532
        %565 = vst [vmem:[#allocation3 + $0x1c] sm:$0xf] %v533
        %566 = vst [vmem:[#allocation3 + $0x20] sm:$0xf] %v534
        %567 = vst [vmem:[#allocation3 + $0x24] sm:$0xf] %v535
        %568 = vst [vmem:[#allocation3 + $0x28] sm:$0xf] %v536
        %569 = vst [vmem:[#allocation3 + $0x2c] sm:$0xf] %v537
        %570 = vst [vmem:[#allocation3 + $0x30] sm:$0xf] %v538
        %571 = vst [vmem:[#allocation3 + $0x34] sm:$0xf] %v539
        %572 = vst [vmem:[#allocation3 + $0x38] sm:$0xf] %v540
        %573 = vst [vmem:[#allocation3 + $0x3c] sm:$0xf] %v541
        %574 = vst [vmem:[#allocation4] sm:$0xff] %v478
        %575 = vst [vmem:[#allocation4 + $0x8] sm:$0xff] %v479
        %576 = vst [vmem:[#allocation4 + $0x10] sm:$0xff] %v480
        %577 = vst [vmem:[#allocation4 + $0x18] sm:$0xff] %v481
        %578 = vst [vmem:[#allocation4 + $0x20] sm:$0xff] %v482
        %579 = vst [vmem:[#allocation4 + $0x28] sm:$0xff] %v483
        %580 = vst [vmem:[#allocation4 + $0x30] sm:$0xff] %v484
        %581 = vst [vmem:[#allocation4 + $0x38] sm:$0xff] %v485
        %582 = vst [vmem:[#allocation4 + $0x40] sm:$0xff] %v486
        %583 = vst [vmem:[#allocation4 + $0x48] sm:$0xff] %v487
        %584 = vst [vmem:[#allocation4 + $0x50] sm:$0xff] %v488
        %585 = vst [vmem:[#allocation4 + $0x58] sm:$0xff] %v489
        %586 = vst [vmem:[#allocation4 + $0x60] sm:$0xff] %v490
        %587 = vst [vmem:[#allocation4 + $0x68] sm:$0xff] %v491
        %588 = vst [vmem:[#allocation4 + $0x70] sm:$0xff] %v492
        %589 = vst [vmem:[#allocation4 + $0x78] sm:$0xff] %v493
        %s590 = smul.u32 4, 16
        %s591 = smul.u32 %s590, 1
        %s592 = sshll.u32 %s591, 4
        %593 = dma.done [#allocation5], %s592
      $region40: #{agcn_net_forward.1} parent=35 // pred_fallthru
        _
      %s594 = sld [smem:[#allocation7 + %s23]]
      %v595 = vld [vmem:[#allocation2] sm:$0xf]
      %v596 = vld [vmem:[#allocation2 + $0x4] sm:$0xf]
      %v597 = vld [vmem:[#allocation2 + $0x8] sm:$0xf]
      %v598 = vld [vmem:[#allocation2 + $0xc] sm:$0xf]
      %v599 = vld [vmem:[#allocation2 + $0x10] sm:$0xf]
      %v600 = vld [vmem:[#allocation2 + $0x14] sm:$0xf]
      %v601 = vld [vmem:[#allocation2 + $0x18] sm:$0xf]
      %v602 = vld [vmem:[#allocation2 + $0x1c] sm:$0xf]
      %v603 = vld [vmem:[#allocation2 + $0x20] sm:$0xf]
      %v604 = vld [vmem:[#allocation2 + $0x24] sm:$0xf]
      %v605 = vld [vmem:[#allocation2 + $0x28] sm:$0xf]
      %v606 = vld [vmem:[#allocation2 + $0x2c] sm:$0xf]
      %v607 = vld [vmem:[#allocation2 + $0x30] sm:$0xf]
      %v608 = vld [vmem:[#allocation2 + $0x34] sm:$0xf]
      %v609 = vld [vmem:[#allocation2 + $0x38] sm:$0xf]
      %v610 = vld [vmem:[#allocation2 + $0x3c] sm:$0xf]
      %v611 = vld [vmem:[#allocation3] sm:$0xf]
      %v612 = vld [vmem:[#allocation3 + $0x4] sm:$0xf]
      %v613 = vld [vmem:[#allocation3 + $0x8] sm:$0xf]
      %v614 = vld [vmem:[#allocation3 + $0xc] sm:$0xf]
      %v615 = vld [vmem:[#allocation3 + $0x10] sm:$0xf]
      %v616 = vld [vmem:[#allocation3 + $0x14] sm:$0xf]
      %v617 = vld [vmem:[#allocation3 + $0x18] sm:$0xf]
      %v618 = vld [vmem:[#allocation3 + $0x1c] sm:$0xf]
      %v619 = vld [vmem:[#allocation3 + $0x20] sm:$0xf]
      %v620 = vld [vmem:[#allocation3 + $0x24] sm:$0xf]
      %v621 = vld [vmem:[#allocation3 + $0x28] sm:$0xf]
      %v622 = vld [vmem:[#allocation3 + $0x2c] sm:$0xf]
      %v623 = vld [vmem:[#allocation3 + $0x30] sm:$0xf]
      %v624 = vld [vmem:[#allocation3 + $0x34] sm:$0xf]
      %v625 = vld [vmem:[#allocation3 + $0x38] sm:$0xf]
      %v626 = vld [vmem:[#allocation3 + $0x3c] sm:$0xf]
      %v643 = vunpack.c.l.b16 %v595
      %v644 = vunpack.c.l.b16 %v596
      %v645 = vunpack.c.l.b16 %v597
      %v646 = vunpack.c.l.b16 %v598
      %v647 = vunpack.c.l.b16 %v599
      %v648 = vunpack.c.l.b16 %v600
      %v649 = vunpack.c.l.b16 %v601
      %v650 = vunpack.c.l.b16 %v602
      %v651 = vunpack.c.l.b16 %v603
      %v652 = vunpack.c.l.b16 %v604
      %v653 = vunpack.c.l.b16 %v605
      %v654 = vunpack.c.l.b16 %v606
      %v655 = vunpack.c.l.b16 %v607
      %v656 = vunpack.c.l.b16 %v608
      %v657 = vunpack.c.l.b16 %v609
      %v658 = vunpack.c.l.b16 %v610
      %v659 = vpack.c.b16 %v644, %v643
      %v660 = vpack.c.b16 %v646, %v645
      %v661 = vpack.c.b16 %v648, %v647
      %v662 = vpack.c.b16 %v650, %v649
      %v663 = vpack.c.b16 %v652, %v651
      %v664 = vpack.c.b16 %v654, %v653
      %v665 = vpack.c.b16 %v656, %v655
      %v666 = vpack.c.b16 %v658, %v657
      %v691 = vunpack.c.l.b16 %v611
      %v692 = vunpack.c.l.b16 %v612
      %v693 = vunpack.c.l.b16 %v613
      %v694 = vunpack.c.l.b16 %v614
      %v695 = vunpack.c.l.b16 %v615
      %v696 = vunpack.c.l.b16 %v616
      %v697 = vunpack.c.l.b16 %v617
      %v698 = vunpack.c.l.b16 %v618
      %v699 = vunpack.c.l.b16 %v619
      %v700 = vunpack.c.l.b16 %v620
      %v701 = vunpack.c.l.b16 %v621
      %v702 = vunpack.c.l.b16 %v622
      %v703 = vunpack.c.l.b16 %v623
      %v704 = vunpack.c.l.b16 %v624
      %v705 = vunpack.c.l.b16 %v625
      %v706 = vunpack.c.l.b16 %v626
      %v707 = vpack.c.b16 %v692, %v691
      %v708 = vpack.c.b16 %v694, %v693
      %v709 = vpack.c.b16 %v696, %v695
      %v710 = vpack.c.b16 %v698, %v697
      %v711 = vpack.c.b16 %v700, %v699
      %v712 = vpack.c.b16 %v702, %v701
      %v713 = vpack.c.b16 %v704, %v703
      %v714 = vpack.c.b16 %v706, %v705
      %723 = vmatprep.subr.bf16.mxu0 0
      %724 = vmatpush1.bf16.msra.mxu0 %v714
      %725 = vmatprep.subr.bf16.mxu0 0
      %726 = vmatpush1.bf16.msra.mxu0 %v713
      %727 = vmatprep.subr.bf16.mxu0 0
      %728 = vmatpush1.bf16.msra.mxu0 %v712
      %729 = vmatprep.subr.bf16.mxu0 0
      %730 = vmatpush1.bf16.msra.mxu0 %v711
      %731 = vmatprep.subr.bf16.mxu0 0
      %732 = vmatpush1.bf16.msra.mxu0 %v710
      %733 = vmatprep.subr.bf16.mxu0 0
      %734 = vmatpush1.bf16.msra.mxu0 %v709
      %735 = vmatprep.subr.bf16.mxu0 0
      %736 = vmatpush1.bf16.msra.mxu0 %v708
      %737 = vmatprep.subr.bf16.mxu0 0
      %738 = vmatpush1.bf16.msra.mxu0 %v707
      %739 = vmatprep.subr.bf16.mxu0 0
      %740 = vmatpush2.bf16.msra.mxu0 0
      %741 = vmatprep.subr.bf16.mxu0 0
      %742 = vmatpush2.bf16.msra.mxu0 0
      %743 = vmatprep.subr.bf16.mxu0 0
      %744 = vmatpush2.bf16.msra.mxu0 0
      %745 = vmatprep.subr.bf16.mxu0 0
      %746 = vmatpush2.bf16.msra.mxu0 0
      %747 = vmatprep.subr.bf16.mxu0 0
      %748 = vmatpush2.bf16.msra.mxu0 0
      %749 = vmatprep.subr.bf16.mxu0 0
      %750 = vmatpush2.bf16.msra.mxu0 0
      %751 = vmatprep.subr.bf16.mxu0 0
      %752 = vmatpush2.bf16.msra.mxu0 0
      %753 = vmatprep.subr.bf16.mxu0 0
      %754 = vmatpush2.bf16.msra.mxu0 0
      %755 = vmatprep.mubr.bf16.mxu0 0
      %756 = vmatmul.mubr.bf16.gmra.mxu0 %v659
      %v757 = vpop.f32.mrf.mxu0
      %v758 = vadd.f32 0.0, %v757
      %v759 = vpop.f32.mrf.mxu0
      %v760 = vpop.f32.mrf.mxu0
      %v761 = vadd.f32 0.0, %v760
      %v762 = vpop.f32.mrf.mxu0
      %763 = vmatprep.mubr.bf16.mxu0 0
      %764 = vmatmul.mubr.bf16.gmra.mxu0 %v660
      %v765 = vpop.f32.mrf.mxu0
      %v766 = vadd.f32 0.0, %v765
      %v767 = vpop.f32.mrf.mxu0
      %v768 = vpop.f32.mrf.mxu0
      %v769 = vadd.f32 0.0, %v768
      %v770 = vpop.f32.mrf.mxu0
      %771 = vmatprep.mubr.bf16.mxu0 0
      %772 = vmatmul.mubr.bf16.gmra.mxu0 %v661
      %v773 = vpop.f32.mrf.mxu0
      %v774 = vadd.f32 0.0, %v773
      %v775 = vpop.f32.mrf.mxu0
      %v776 = vpop.f32.mrf.mxu0
      %v777 = vadd.f32 0.0, %v776
      %v778 = vpop.f32.mrf.mxu0
      %779 = vmatprep.mubr.bf16.mxu0 0
      %780 = vmatmul.mubr.bf16.gmra.mxu0 %v662
      %v781 = vpop.f32.mrf.mxu0
      %v782 = vadd.f32 0.0, %v781
      %v783 = vpop.f32.mrf.mxu0
      %v784 = vpop.f32.mrf.mxu0
      %v785 = vadd.f32 0.0, %v784
      %v786 = vpop.f32.mrf.mxu0
      %787 = vmatprep.mubr.bf16.mxu0 0
      %788 = vmatmul.mubr.bf16.gmra.mxu0 %v663
      %v789 = vpop.f32.mrf.mxu0
      %v790 = vadd.f32 0.0, %v789
      %v791 = vpop.f32.mrf.mxu0
      %v792 = vpop.f32.mrf.mxu0
      %v793 = vadd.f32 0.0, %v792
      %v794 = vpop.f32.mrf.mxu0
      %795 = vmatprep.mubr.bf16.mxu0 0
      %796 = vmatmul.mubr.bf16.gmra.mxu0 %v664
      %v797 = vpop.f32.mrf.mxu0
      %v798 = vadd.f32 0.0, %v797
      %v799 = vpop.f32.mrf.mxu0
      %v800 = vpop.f32.mrf.mxu0
      %v801 = vadd.f32 0.0, %v800
      %v802 = vpop.f32.mrf.mxu0
      %803 = vmatprep.mubr.bf16.mxu0 0
      %804 = vmatmul.mubr.bf16.gmra.mxu0 %v665
      %v805 = vpop.f32.mrf.mxu0
      %v806 = vadd.f32 0.0, %v805
      %v807 = vpop.f32.mrf.mxu0
      %v808 = vpop.f32.mrf.mxu0
      %v809 = vadd.f32 0.0, %v808
      %v810 = vpop.f32.mrf.mxu0
      %811 = vmatprep.mubr.bf16.mxu0 0
      %812 = vmatmul.mubr.bf16.gmra.mxu0 %v666
      %v813 = vpop.f32.mrf.mxu0
      %v814 = vadd.f32 0.0, %v813
      %v815 = vpop.f32.mrf.mxu0
      %v816 = vpop.f32.mrf.mxu0
      %v817 = vadd.f32 0.0, %v816
      %v818 = vpop.f32.mrf.mxu0
      %819 = vdwg.mxu0
      %v820 = vstv %s594
      %v821 = vmul.f32 %v820, %v758
      %v822 = vmul.f32 %v820, %v761
      %v823 = vmul.f32 %v820, %v766
      %v824 = vmul.f32 %v820, %v769
      %v825 = vmul.f32 %v820, %v774
      %v826 = vmul.f32 %v820, %v777
      %v827 = vmul.f32 %v820, %v782
      %v828 = vmul.f32 %v820, %v785
      %v829 = vmul.f32 %v820, %v790
      %v830 = vmul.f32 %v820, %v793
      %v831 = vmul.f32 %v820, %v798
      %v832 = vmul.f32 %v820, %v801
      %v833 = vmul.f32 %v820, %v806
      %v834 = vmul.f32 %v820, %v809
      %v835 = vmul.f32 %v820, %v814
      %v836 = vmul.f32 %v820, %v817
      %s837 = ssub.f32 1.0, %s594
      %v838 = vld [vmem:[#allocation4] sm:$0xff]
      %v839 = vld [vmem:[#allocation4 + $0x8] sm:$0xff]
      %v840 = vld [vmem:[#allocation4 + $0x10] sm:$0xff]
      %v841 = vld [vmem:[#allocation4 + $0x18] sm:$0xff]
      %v842 = vld [vmem:[#allocation4 + $0x20] sm:$0xff]
      %v843 = vld [vmem:[#allocation4 + $0x28] sm:$0xff]
      %v844 = vld [vmem:[#allocation4 + $0x30] sm:$0xff]
      %v845 = vld [vmem:[#allocation4 + $0x38] sm:$0xff]
      %v846 = vld [vmem:[#allocation4 + $0x40] sm:$0xff]
      %v847 = vld [vmem:[#allocation4 + $0x48] sm:$0xff]
      %v848 = vld [vmem:[#allocation4 + $0x50] sm:$0xff]
      %v849 = vld [vmem:[#allocation4 + $0x58] sm:$0xff]
      %v850 = vld [vmem:[#allocation4 + $0x60] sm:$0xff]
      %v851 = vld [vmem:[#allocation4 + $0x68] sm:$0xff]
      %v852 = vld [vmem:[#allocation4 + $0x70] sm:$0xff]
      %v853 = vld [vmem:[#allocation4 + $0x78] sm:$0xff]
      %v854 = vstv %s837
      %v855 = vmul.f32 %v854, %v838
      %v856 = vmul.f32 %v854, %v839
      %v857 = vmul.f32 %v854, %v840
      %v858 = vmul.f32 %v854, %v841
      %v859 = vmul.f32 %v854, %v842
      %v860 = vmul.f32 %v854, %v843
      %v861 = vmul.f32 %v854, %v844
      %v862 = vmul.f32 %v854, %v845
      %v863 = vmul.f32 %v854, %v846
      %v864 = vmul.f32 %v854, %v847
      %v865 = vmul.f32 %v854, %v848
      %v866 = vmul.f32 %v854, %v849
      %v867 = vmul.f32 %v854, %v850
      %v868 = vmul.f32 %v854, %v851
      %v869 = vmul.f32 %v854, %v852
      %v870 = vmul.f32 %v854, %v853
      %v871 = vadd.f32 %v821, %v855
      %v872 = vadd.f32 %v822, %v856
      %v873 = vadd.f32 %v823, %v857
      %v874 = vadd.f32 %v824, %v858
      %v875 = vadd.f32 %v825, %v859
      %v876 = vadd.f32 %v826, %v860
      %v877 = vadd.f32 %v827, %v861
      %v878 = vadd.f32 %v828, %v862
      %v879 = vadd.f32 %v829, %v863
      %v880 = vadd.f32 %v830, %v864
      %v881 = vadd.f32 %v831, %v865
      %v882 = vadd.f32 %v832, %v866
      %v883 = vadd.f32 %v833, %v867
      %v884 = vadd.f32 %v834, %v868
      %v885 = vadd.f32 %v835, %v869
      %v886 = vadd.f32 %v836, %v870
      %v887 = vpack.c.bf16 %v872, %v871
      %v888 = vpack.c.bf16 %v874, %v873
      %v889 = vpack.c.bf16 %v876, %v875
      %v890 = vpack.c.bf16 %v878, %v877
      %v891 = vpack.c.bf16 %v880, %v879
      %v892 = vpack.c.bf16 %v882, %v881
      %v893 = vpack.c.bf16 %v884, %v883
      %v894 = vpack.c.bf16 %v886, %v885
      %v895 = vld [vmem:[%s190] sm:$0xf]
      %v896 = vld [vmem:[%s190 + $0x4] sm:$0xf]
      %v897 = vld [vmem:[%s190 + $0x8] sm:$0xf]
      %v898 = vld [vmem:[%s190 + $0xc] sm:$0xf]
      %v899 = vld [vmem:[%s190 + $0x10] sm:$0xf]
      %v900 = vld [vmem:[%s190 + $0x14] sm:$0xf]
      %v901 = vld [vmem:[%s190 + $0x18] sm:$0xf]
      %v902 = vld [vmem:[%s190 + $0x1c] sm:$0xf]
      %v903 = vld [vmem:[%s190 + $0x20] sm:$0xf]
      %v904 = vld [vmem:[%s190 + $0x24] sm:$0xf]
      %v905 = vld [vmem:[%s190 + $0x28] sm:$0xf]
      %v906 = vld [vmem:[%s190 + $0x2c] sm:$0xf]
      %v907 = vld [vmem:[%s190 + $0x30] sm:$0xf]
      %v908 = vld [vmem:[%s190 + $0x34] sm:$0xf]
      %v909 = vld [vmem:[%s190 + $0x38] sm:$0xf]
      %v910 = vld [vmem:[%s190 + $0x3c] sm:$0xf]
      %v927 = vunpack.c.l.b16 %v895
      %v928 = vunpack.c.l.b16 %v896
      %v929 = vunpack.c.l.b16 %v897
      %v930 = vunpack.c.l.b16 %v898
      %v931 = vunpack.c.l.b16 %v899
      %v932 = vunpack.c.l.b16 %v900
      %v933 = vunpack.c.l.b16 %v901
      %v934 = vunpack.c.l.b16 %v902
      %v935 = vunpack.c.l.b16 %v903
      %v936 = vunpack.c.l.b16 %v904
      %v937 = vunpack.c.l.b16 %v905
      %v938 = vunpack.c.l.b16 %v906
      %v939 = vunpack.c.l.b16 %v907
      %v940 = vunpack.c.l.b16 %v908
      %v941 = vunpack.c.l.b16 %v909
      %v942 = vunpack.c.l.b16 %v910
      %v943 = vpack.c.b16 %v928, %v927
      %v944 = vpack.c.b16 %v930, %v929
      %v945 = vpack.c.b16 %v932, %v931
      %v946 = vpack.c.b16 %v934, %v933
      %v947 = vpack.c.b16 %v936, %v935
      %v948 = vpack.c.b16 %v938, %v937
      %v949 = vpack.c.b16 %v940, %v939
      %v950 = vpack.c.b16 %v942, %v941
      %959 = vmatprep.subr.bf16.mxu0 0
      %960 = vmatpush1.bf16.msra.mxu0 %v950
      %961 = vmatprep.subr.bf16.mxu0 0
      %962 = vmatpush1.bf16.msra.mxu0 %v949
      %963 = vmatprep.subr.bf16.mxu0 0
      %964 = vmatpush1.bf16.msra.mxu0 %v948
      %965 = vmatprep.subr.bf16.mxu0 0
      %966 = vmatpush1.bf16.msra.mxu0 %v947
      %967 = vmatprep.subr.bf16.mxu0 0
      %968 = vmatpush1.bf16.msra.mxu0 %v946
      %969 = vmatprep.subr.bf16.mxu0 0
      %970 = vmatpush1.bf16.msra.mxu0 %v945
      %971 = vmatprep.subr.bf16.mxu0 0
      %972 = vmatpush1.bf16.msra.mxu0 %v944
      %973 = vmatprep.subr.bf16.mxu0 0
      %974 = vmatpush1.bf16.msra.mxu0 %v943
      %975 = vmatprep.subr.bf16.mxu0 0
      %976 = vmatpush2.bf16.msra.mxu0 0
      %977 = vmatprep.subr.bf16.mxu0 0
      %978 = vmatpush2.bf16.msra.mxu0 0
      %979 = vmatprep.subr.bf16.mxu0 0
      %980 = vmatpush2.bf16.msra.mxu0 0
      %981 = vmatprep.subr.bf16.mxu0 0
      %982 = vmatpush2.bf16.msra.mxu0 0
      %983 = vmatprep.subr.bf16.mxu0 0
      %984 = vmatpush2.bf16.msra.mxu0 0
      %985 = vmatprep.subr.bf16.mxu0 0
      %986 = vmatpush2.bf16.msra.mxu0 0
      %987 = vmatprep.subr.bf16.mxu0 0
      %988 = vmatpush2.bf16.msra.mxu0 0
      %989 = vmatprep.subr.bf16.mxu0 0
      %990 = vmatpush2.bf16.msra.mxu0 0
      %991 = vmatprep.mubr.bf16.mxu0 0
      %992 = vmatmul.mubr.bf16.gmra.mxu0 %v887
      %v993 = vpop.f32.mrf.mxu0
      %v994 = vadd.f32 0.0, %v993
      %v995 = vpop.f32.mrf.mxu0
      %v996 = vpop.f32.mrf.mxu0
      %v997 = vadd.f32 0.0, %v996
      %v998 = vpop.f32.mrf.mxu0
      %999 = vmatprep.mubr.bf16.mxu0 0
      %1000 = vmatmul.mubr.bf16.gmra.mxu0 %v888
      %v1001 = vpop.f32.mrf.mxu0
      %v1002 = vadd.f32 0.0, %v1001
      %v1003 = vpop.f32.mrf.mxu0
      %v1004 = vpop.f32.mrf.mxu0
      %v1005 = vadd.f32 0.0, %v1004
      %v1006 = vpop.f32.mrf.mxu0
      %1007 = vmatprep.mubr.bf16.mxu0 0
      %1008 = vmatmul.mubr.bf16.gmra.mxu0 %v889
      %v1009 = vpop.f32.mrf.mxu0
      %v1010 = vadd.f32 0.0, %v1009
      %v1011 = vpop.f32.mrf.mxu0
      %v1012 = vpop.f32.mrf.mxu0
      %v1013 = vadd.f32 0.0, %v1012
      %v1014 = vpop.f32.mrf.mxu0
      %1015 = vmatprep.mubr.bf16.mxu0 0
      %1016 = vmatmul.mubr.bf16.gmra.mxu0 %v890
      %v1017 = vpop.f32.mrf.mxu0
      %v1018 = vadd.f32 0.0, %v1017
      %v1019 = vpop.f32.mrf.mxu0
      %v1020 = vpop.f32.mrf.mxu0
      %v1021 = vadd.f32 0.0, %v1020
      %v1022 = vpop.f32.mrf.mxu0
      %1023 = vmatprep.mubr.bf16.mxu0 0
      %1024 = vmatmul.mubr.bf16.gmra.mxu0 %v891
      %v1025 = vpop.f32.mrf.mxu0
      %v1026 = vadd.f32 0.0, %v1025
      %v1027 = vpop.f32.mrf.mxu0
      %v1028 = vpop.f32.mrf.mxu0
      %v1029 = vadd.f32 0.0, %v1028
      %v1030 = vpop.f32.mrf.mxu0
      %1031 = vmatprep.mubr.bf16.mxu0 0
      %1032 = vmatmul.mubr.bf16.gmra.mxu0 %v892
      %v1033 = vpop.f32.mrf.mxu0
      %v1034 = vadd.f32 0.0, %v1033
      %v1035 = vpop.f32.mrf.mxu0
      %v1036 = vpop.f32.mrf.mxu0
      %v1037 = vadd.f32 0.0, %v1036
      %v1038 = vpop.f32.mrf.mxu0
      %1039 = vmatprep.mubr.bf16.mxu0 0
      %1040 = vmatmul.mubr.bf16.gmra.mxu0 %v893
      %v1041 = vpop.f32.mrf.mxu0
      %v1042 = vadd.f32 0.0, %v1041
      %v1043 = vpop.f32.mrf.mxu0
      %v1044 = vpop.f32.mrf.mxu0
      %v1045 = vadd.f32 0.0, %v1044
      %v1046 = vpop.f32.mrf.mxu0
      %1047 = vmatprep.mubr.bf16.mxu0 0
      %1048 = vmatmul.mubr.bf16.gmra.mxu0 %v894
      %v1049 = vpop.f32.mrf.mxu0
      %v1050 = vadd.f32 0.0, %v1049
      %v1051 = vpop.f32.mrf.mxu0
      %v1052 = vpop.f32.mrf.mxu0
      %v1053 = vadd.f32 0.0, %v1052
      %v1054 = vpop.f32.mrf.mxu0
      %1055 = vdwg.mxu0
      %v1056 = vmax.f32 %v994, 0.0
      %v1057 = vmax.f32 %v997, 0.0
      %v1058 = vmax.f32 %v1002, 0.0
      %v1059 = vmax.f32 %v1005, 0.0
      %v1060 = vmax.f32 %v1010, 0.0
      %v1061 = vmax.f32 %v1013, 0.0
      %v1062 = vmax.f32 %v1018, 0.0
      %v1063 = vmax.f32 %v1021, 0.0
      %v1064 = vmax.f32 %v1026, 0.0
      %v1065 = vmax.f32 %v1029, 0.0
      %v1066 = vmax.f32 %v1034, 0.0
      %v1067 = vmax.f32 %v1037, 0.0
      %v1068 = vmax.f32 %v1042, 0.0
      %v1069 = vmax.f32 %v1045, 0.0
      %v1070 = vmax.f32 %v1050, 0.0
      %v1071 = vmax.f32 %v1053, 0.0
      %v1072 = vpack.c.bf16 %v1057, %v1056
      %v1073 = vpack.c.bf16 %v1059, %v1058
      %v1074 = vpack.c.bf16 %v1061, %v1060
      %v1075 = vpack.c.bf16 %v1063, %v1062
      %v1076 = vpack.c.bf16 %v1065, %v1064
      %v1077 = vpack.c.bf16 %v1067, %v1066
      %v1078 = vpack.c.bf16 %v1069, %v1068
      %v1079 = vpack.c.bf16 %v1071, %v1070
      %v1088 = vunpack.c.l.b16 %v1072
      %v1089 = vunpack.c.h.b16 %v1072
      %v1090 = vunpack.c.l.b16 %v1073
      %v1091 = vunpack.c.h.b16 %v1073
      %v1092 = vunpack.c.l.b16 %v1074
      %v1093 = vunpack.c.h.b16 %v1074
      %v1094 = vunpack.c.l.b16 %v1075
      %v1095 = vunpack.c.h.b16 %v1075
      %v1096 = vunpack.c.l.b16 %v1076
      %v1097 = vunpack.c.h.b16 %v1076
      %v1098 = vunpack.c.l.b16 %v1077
      %v1099 = vunpack.c.h.b16 %v1077
      %v1100 = vunpack.c.l.b16 %v1078
      %v1101 = vunpack.c.h.b16 %v1078
      %v1102 = vunpack.c.l.b16 %v1079
      %v1103 = vunpack.c.h.b16 %v1079
      %v1104 = vpack.c.b16 %v1088, %v1088
      %v1105 = vpack.c.b16 %v1089, %v1089
      %v1106 = vpack.c.b16 %v1090, %v1090
      %v1107 = vpack.c.b16 %v1091, %v1091
      %v1108 = vpack.c.b16 %v1092, %v1092
      %v1109 = vpack.c.b16 %v1093, %v1093
      %v1110 = vpack.c.b16 %v1094, %v1094
      %v1111 = vpack.c.b16 %v1095, %v1095
      %v1112 = vpack.c.b16 %v1096, %v1096
      %v1113 = vpack.c.b16 %v1097, %v1097
      %v1114 = vpack.c.b16 %v1098, %v1098
      %v1115 = vpack.c.b16 %v1099, %v1099
      %v1116 = vpack.c.b16 %v1100, %v1100
      %v1117 = vpack.c.b16 %v1101, %v1101
      %v1118 = vpack.c.b16 %v1102, %v1102
      %v1119 = vpack.c.b16 %v1103, %v1103
      %1136 = vst [vmem:[#allocation3] sm:$0xf] %v1104
      %1137 = vst [vmem:[#allocation3 + $0x4] sm:$0xf] %v1105
      %1138 = vst [vmem:[#allocation3 + $0x8] sm:$0xf] %v1106
      %1139 = vst [vmem:[#allocation3 + $0xc] sm:$0xf] %v1107
      %1140 = vst [vmem:[#allocation3 + $0x10] sm:$0xf] %v1108
      %1141 = vst [vmem:[#allocation3 + $0x14] sm:$0xf] %v1109
      %1142 = vst [vmem:[#allocation3 + $0x18] sm:$0xf] %v1110
      %1143 = vst [vmem:[#allocation3 + $0x1c] sm:$0xf] %v1111
      %1144 = vst [vmem:[#allocation3 + $0x20] sm:$0xf] %v1112
      %1145 = vst [vmem:[#allocation3 + $0x24] sm:$0xf] %v1113
      %1146 = vst [vmem:[#allocation3 + $0x28] sm:$0xf] %v1114
      %1147 = vst [vmem:[#allocation3 + $0x2c] sm:$0xf] %v1115
      %1148 = vst [vmem:[#allocation3 + $0x30] sm:$0xf] %v1116
      %1149 = vst [vmem:[#allocation3 + $0x34] sm:$0xf] %v1117
      %1150 = vst [vmem:[#allocation3 + $0x38] sm:$0xf] %v1118
      %1151 = vst [vmem:[#allocation3 + $0x3c] sm:$0xf] %v1119
      %p1152 = scmp.eq.s32.totalorder %s23, 1
      // Predicated region
      $region75: #{agcn_net_forward.1} parent=35 // pred_check
        %p1153 = pneg %p1152
      $region76: #{agcn_net_forward.1} parent=35 // pred_check_branch
        %1155 = sbr.rel (%p1153) target = $region78
      $region77: #{agcn_net_forward.1} parent=35 // pred_region
        %v1156 = vld [vmem:[#allocation3] sm:$0xf]
        %v1157 = vld [vmem:[#allocation3 + $0x4] sm:$0xf]
        %v1158 = vld [vmem:[#allocation3 + $0x8] sm:$0xf]
        %v1159 = vld [vmem:[#allocation3 + $0xc] sm:$0xf]
        %v1160 = vld [vmem:[#allocation3 + $0x10] sm:$0xf]
        %v1161 = vld [vmem:[#allocation3 + $0x14] sm:$0xf]
        %v1162 = vld [vmem:[#allocation3 + $0x18] sm:$0xf]
        %v1163 = vld [vmem:[#allocation3 + $0x1c] sm:$0xf]
        %v1164 = vld [vmem:[#allocation3 + $0x20] sm:$0xf]
        %v1165 = vld [vmem:[#allocation3 + $0x24] sm:$0xf]
        %v1166 = vld [vmem:[#allocation3 + $0x28] sm:$0xf]
        %v1167 = vld [vmem:[#allocation3 + $0x2c] sm:$0xf]
        %v1168 = vld [vmem:[#allocation3 + $0x30] sm:$0xf]
        %v1169 = vld [vmem:[#allocation3 + $0x34] sm:$0xf]
        %v1170 = vld [vmem:[#allocation3 + $0x38] sm:$0xf]
        %v1171 = vld [vmem:[#allocation3 + $0x3c] sm:$0xf]
        %v1172 = vld [vmem:[%s4] sm:$0xf]
        %v1173 = vld [vmem:[%s4 + $0x4] sm:$0xf]
        %v1174 = vld [vmem:[%s4 + $0x8] sm:$0xf]
        %v1175 = vld [vmem:[%s4 + $0xc] sm:$0xf]
        %v1176 = vld [vmem:[%s4 + $0x10] sm:$0xf]
        %v1177 = vld [vmem:[%s4 + $0x14] sm:$0xf]
        %v1178 = vld [vmem:[%s4 + $0x18] sm:$0xf]
        %v1179 = vld [vmem:[%s4 + $0x1c] sm:$0xf]
        %v1180 = vld [vmem:[%s4 + $0x20] sm:$0xf]
        %v1181 = vld [vmem:[%s4 + $0x24] sm:$0xf]
        %v1182 = vld [vmem:[%s4 + $0x28] sm:$0xf]
        %v1183 = vld [vmem:[%s4 + $0x2c] sm:$0xf]
        %v1184 = vld [vmem:[%s4 + $0x30] sm:$0xf]
        %v1185 = vld [vmem:[%s4 + $0x34] sm:$0xf]
        %v1186 = vld [vmem:[%s4 + $0x38] sm:$0xf]
        %v1187 = vld [vmem:[%s4 + $0x3c] sm:$0xf]
        %v1204 = vunpack.c.l.b16 %v1156
        %v1205 = vunpack.c.l.b16 %v1157
        %v1206 = vunpack.c.l.b16 %v1158
        %v1207 = vunpack.c.l.b16 %v1159
        %v1208 = vunpack.c.l.b16 %v1160
        %v1209 = vunpack.c.l.b16 %v1161
        %v1210 = vunpack.c.l.b16 %v1162
        %v1211 = vunpack.c.l.b16 %v1163
        %v1212 = vunpack.c.l.b16 %v1164
        %v1213 = vunpack.c.l.b16 %v1165
        %v1214 = vunpack.c.l.b16 %v1166
        %v1215 = vunpack.c.l.b16 %v1167
        %v1216 = vunpack.c.l.b16 %v1168
        %v1217 = vunpack.c.l.b16 %v1169
        %v1218 = vunpack.c.l.b16 %v1170
        %v1219 = vunpack.c.l.b16 %v1171
        %v1220 = vpack.c.b16 %v1205, %v1204
        %v1221 = vpack.c.b16 %v1207, %v1206
        %v1222 = vpack.c.b16 %v1209, %v1208
        %v1223 = vpack.c.b16 %v1211, %v1210
        %v1224 = vpack.c.b16 %v1213, %v1212
        %v1225 = vpack.c.b16 %v1215, %v1214
        %v1226 = vpack.c.b16 %v1217, %v1216
        %v1227 = vpack.c.b16 %v1219, %v1218
        %v1252 = vunpack.c.l.b16 %v1172
        %v1253 = vunpack.c.l.b16 %v1173
        %v1254 = vunpack.c.l.b16 %v1174
        %v1255 = vunpack.c.l.b16 %v1175
        %v1256 = vunpack.c.l.b16 %v1176
        %v1257 = vunpack.c.l.b16 %v1177
        %v1258 = vunpack.c.l.b16 %v1178
        %v1259 = vunpack.c.l.b16 %v1179
        %v1260 = vunpack.c.l.b16 %v1180
        %v1261 = vunpack.c.l.b16 %v1181
        %v1262 = vunpack.c.l.b16 %v1182
        %v1263 = vunpack.c.l.b16 %v1183
        %v1264 = vunpack.c.l.b16 %v1184
        %v1265 = vunpack.c.l.b16 %v1185
        %v1266 = vunpack.c.l.b16 %v1186
        %v1267 = vunpack.c.l.b16 %v1187
        %v1268 = vpack.c.b16 %v1253, %v1252
        %v1269 = vpack.c.b16 %v1255, %v1254
        %v1270 = vpack.c.b16 %v1257, %v1256
        %v1271 = vpack.c.b16 %v1259, %v1258
        %v1272 = vpack.c.b16 %v1261, %v1260
        %v1273 = vpack.c.b16 %v1263, %v1262
        %v1274 = vpack.c.b16 %v1265, %v1264
        %v1275 = vpack.c.b16 %v1267, %v1266
        %1284 = vmatprep.subr.bf16.mxu0 0
        %1285 = vmatpush1.bf16.msra.mxu0 %v1275
        %1286 = vmatprep.subr.bf16.mxu0 0
        %1287 = vmatpush1.bf16.msra.mxu0 %v1274
        %1288 = vmatprep.subr.bf16.mxu0 0
        %1289 = vmatpush1.bf16.msra.mxu0 %v1273
        %1290 = vmatprep.subr.bf16.mxu0 0
        %1291 = vmatpush1.bf16.msra.mxu0 %v1272
        %1292 = vmatprep.subr.bf16.mxu0 0
        %1293 = vmatpush1.bf16.msra.mxu0 %v1271
        %1294 = vmatprep.subr.bf16.mxu0 0
        %1295 = vmatpush1.bf16.msra.mxu0 %v1270
        %1296 = vmatprep.subr.bf16.mxu0 0
        %1297 = vmatpush1.bf16.msra.mxu0 %v1269
        %1298 = vmatprep.subr.bf16.mxu0 0
        %1299 = vmatpush1.bf16.msra.mxu0 %v1268
        %1300 = vmatprep.subr.bf16.mxu0 0
        %1301 = vmatpush2.bf16.msra.mxu0 0
        %1302 = vmatprep.subr.bf16.mxu0 0
        %1303 = vmatpush2.bf16.msra.mxu0 0
        %1304 = vmatprep.subr.bf16.mxu0 0
        %1305 = vmatpush2.bf16.msra.mxu0 0
        %1306 = vmatprep.subr.bf16.mxu0 0
        %1307 = vmatpush2.bf16.msra.mxu0 0
        %1308 = vmatprep.subr.bf16.mxu0 0
        %1309 = vmatpush2.bf16.msra.mxu0 0
        %1310 = vmatprep.subr.bf16.mxu0 0
        %1311 = vmatpush2.bf16.msra.mxu0 0
        %1312 = vmatprep.subr.bf16.mxu0 0
        %1313 = vmatpush2.bf16.msra.mxu0 0
        %1314 = vmatprep.subr.bf16.mxu0 0
        %1315 = vmatpush2.bf16.msra.mxu0 0
        %1316 = vmatprep.mubr.bf16.mxu0 0
        %1317 = vmatmul.mubr.bf16.gmra.mxu0 %v1220
        %v1318 = vpop.f32.mrf.mxu0
        %v1319 = vadd.f32 0.0, %v1318
        %v1320 = vpop.f32.mrf.mxu0
        %v1321 = vpop.f32.mrf.mxu0
        %v1322 = vadd.f32 0.0, %v1321
        %v1323 = vpop.f32.mrf.mxu0
        %1324 = vmatprep.mubr.bf16.mxu0 0
        %1325 = vmatmul.mubr.bf16.gmra.mxu0 %v1221
        %v1326 = vpop.f32.mrf.mxu0
        %v1327 = vadd.f32 0.0, %v1326
        %v1328 = vpop.f32.mrf.mxu0
        %v1329 = vpop.f32.mrf.mxu0
        %v1330 = vadd.f32 0.0, %v1329
        %v1331 = vpop.f32.mrf.mxu0
        %1332 = vmatprep.mubr.bf16.mxu0 0
        %1333 = vmatmul.mubr.bf16.gmra.mxu0 %v1222
        %v1334 = vpop.f32.mrf.mxu0
        %v1335 = vadd.f32 0.0, %v1334
        %v1336 = vpop.f32.mrf.mxu0
        %v1337 = vpop.f32.mrf.mxu0
        %v1338 = vadd.f32 0.0, %v1337
        %v1339 = vpop.f32.mrf.mxu0
        %1340 = vmatprep.mubr.bf16.mxu0 0
        %1341 = vmatmul.mubr.bf16.gmra.mxu0 %v1223
        %v1342 = vpop.f32.mrf.mxu0
        %v1343 = vadd.f32 0.0, %v1342
        %v1344 = vpop.f32.mrf.mxu0
        %v1345 = vpop.f32.mrf.mxu0
        %v1346 = vadd.f32 0.0, %v1345
        %v1347 = vpop.f32.mrf.mxu0
        %1348 = vmatprep.mubr.bf16.mxu0 0
        %1349 = vmatmul.mubr.bf16.gmra.mxu0 %v1224
        %v1350 = vpop.f32.mrf.mxu0
        %v1351 = vadd.f32 0.0, %v1350
        %v1352 = vpop.f32.mrf.mxu0
        %v1353 = vpop.f32.mrf.mxu0
        %v1354 = vadd.f32 0.0, %v1353
        %v1355 = vpop.f32.mrf.mxu0
        %1356 = vmatprep.mubr.bf16.mxu0 0
        %1357 = vmatmul.mubr.bf16.gmra.mxu0 %v1225
        %v1358 = vpop.f32.mrf.mxu0
        %v1359 = vadd.f32 0.0, %v1358
        %v1360 = vpop.f32.mrf.mxu0
        %v1361 = vpop.f32.mrf.mxu0
        %v1362 = vadd.f32 0.0, %v1361
        %v1363 = vpop.f32.mrf.mxu0
        %1364 = vmatprep.mubr.bf16.mxu0 0
        %1365 = vmatmul.mubr.bf16.gmra.mxu0 %v1226
        %v1366 = vpop.f32.mrf.mxu0
        %v1367 = vadd.f32 0.0, %v1366
        %v1368 = vpop.f32.mrf.mxu0
        %v1369 = vpop.f32.mrf.mxu0
        %v1370 = vadd.f32 0.0, %v1369
        %v1371 = vpop.f32.mrf.mxu0
        %1372 = vmatprep.mubr.bf16.mxu0 0
        %1373 = vmatmul.mubr.bf16.gmra.mxu0 %v1227
        %v1374 = vpop.f32.mrf.mxu0
        %v1375 = vadd.f32 0.0, %v1374
        %v1376 = vpop.f32.mrf.mxu0
        %v1377 = vpop.f32.mrf.mxu0
        %v1378 = vadd.f32 0.0, %v1377
        %v1379 = vpop.f32.mrf.mxu0
        %1380 = vdwg.mxu0
        %1381 = vst [vmem:[%s6] sm:$0xff] %v1319
        %1382 = vst [vmem:[%s6 + $0x8] sm:$0xff] %v1322
        %1383 = vst [vmem:[%s6 + $0x10] sm:$0xff] %v1327
        %1384 = vst [vmem:[%s6 + $0x18] sm:$0xff] %v1330
        %1385 = vst [vmem:[%s6 + $0x20] sm:$0xff] %v1335
        %1386 = vst [vmem:[%s6 + $0x28] sm:$0xff] %v1338
        %1387 = vst [vmem:[%s6 + $0x30] sm:$0xff] %v1343
        %1388 = vst [vmem:[%s6 + $0x38] sm:$0xff] %v1346
        %1389 = vst [vmem:[%s6 + $0x40] sm:$0xff] %v1351
        %1390 = vst [vmem:[%s6 + $0x48] sm:$0xff] %v1354
        %1391 = vst [vmem:[%s6 + $0x50] sm:$0xff] %v1359
        %1392 = vst [vmem:[%s6 + $0x58] sm:$0xff] %v1362
        %1393 = vst [vmem:[%s6 + $0x60] sm:$0xff] %v1367
        %1394 = vst [vmem:[%s6 + $0x68] sm:$0xff] %v1370
        %1395 = vst [vmem:[%s6 + $0x70] sm:$0xff] %v1375
        %1396 = vst [vmem:[%s6 + $0x78] sm:$0xff] %v1378
      $region78: #{agcn_net_forward.1} parent=35 // pred_fallthru
        _
      // Predicated region
      $region79: #{agcn_net_forward.1} parent=35 // pred_check
        %p1397 = pneg %p125
      $region80: #{agcn_net_forward.1} parent=35 // pred_check_branch
        %1399 = sbr.rel (%p1397) target = $region82
      $region81: #{agcn_net_forward.1} parent=35 // pred_region
        _
      $region82: #{agcn_net_forward.1} parent=35 // pred_fallthru
        _
      // Predicated region
      $region83: #{agcn_net_forward.1} parent=35 // pred_check
        %p1400 = pneg %p125
      $region84: #{agcn_net_forward.1} parent=35 // pred_check_branch
        %1402 = sbr.rel (%p1400) target = $region86
      $region85: #{agcn_net_forward.1} parent=35 // pred_region
        _
      $region86: #{agcn_net_forward.1} parent=35 // pred_fallthru
        _
    $region36: #{agcn_net_forward.1} parent=5 // pred_fallthru
      _
    %p1403 = scmp.le.s32.totalorder 2, %s18
    // Predicated region
    $region87: #{agcn_net_forward.1} parent=5 // pred_check
      %p1404 = pneg %p1403
    $region88: #{agcn_net_forward.1} parent=5 // pred_check_branch
      %1406 = sbr.rel (%p1404) target = $region90
    $region89: #{agcn_net_forward.1} parent=5 // pred_region
      %s1407 = ssub.s32 %s18, 2
    $region90: #{agcn_net_forward.1} parent=5 // pred_fallthru
      _
  $region6: #{agcn_net_forward.1} parent=0 // loop_footer
    %s22 = sadd.s32 1, %s18
  $region7: #{agcn_net_forward.1} parent=0 // loop_footer_branch
    %17 = sbr.rel target = $region3
  $region8: #{agcn_net_forward.1} parent=0 // loop_exit
    _
  %1408 = vsyncmov [#allocation5]
  %s1409 = vpop.sfrf %1408
  %p1410 = scmp.eq.s32.totalorder %s1409, 0
  %p1411 = pneg %p1410
  %1413 = shalt.err (%p1411)

</llo_original>
